<compile_context>
chip_gen: v5e
topology: v5e:2x2
jax: 0.10.0
libtpu: 0.0.40
codegen_flags: <defaults>
</compile_context>

<pallas_src>
import numpy as np

import jax
import jax.numpy as jnp
from jax.experimental import pallas as pl
from jax.experimental.pallas import tpu as pltpu

EPS = 1e-5  # nn.InstanceNorm2d default


def _round_up(x, m):
    return ((x + m - 1) // m) * m


# --------------------------------------------------------------------------- Pallas kernels
def _gemm_bias_kernel(x_ref, w_ref, b_ref, o_ref):
    # x: (TM, Kpad) bf16, w: (Kpad, Cpad) bf16, b: (1, Cpad) f32 -> o: (TM, Cpad) f32
    acc = jnp.dot(x_ref[...], w_ref[...], preferred_element_type=jnp.float32)
    o_ref[...] = acc + b_ref[...]


def _inorm_prelu_kernel(slope_ref, y_ref, o_ref):
    # y: (1, HW, Cpad) f32 ; per-(sample, channel) InstanceNorm over HW, then PReLU.
    y = y_ref[...]
    mean = jnp.mean(y, axis=1, keepdims=True)
    var = jnp.mean((y - mean) ** 2, axis=1, keepdims=True)
    yn = (y - mean) * jax.lax.rsqrt(var + EPS)
    slope = slope_ref[0]
    o_ref[...] = jnp.where(yn >= 0.0, yn, slope * yn)


def _inorm_residual_kernel(y_ref, r_ref, o_ref):
    # InstanceNorm over HW, then residual add with r (the ResnetBlock skip connection).
    y = y_ref[...]
    mean = jnp.mean(y, axis=1, keepdims=True)
    var = jnp.mean((y - mean) ** 2, axis=1, keepdims=True)
    yn = (y - mean) * jax.lax.rsqrt(var + EPS)
    o_ref[...] = r_ref[...] + yn


# --------------------------------------------------------------------------- conv wrapper
def conv3x3_reflect(x_nhwc, w_oihw, bias):
    """3x3 conv, stride 1, ReflectionPad2d(1), bias; returns f32 (N, H, W, Cout_pad)
    with Cout padded (zeros) up to a multiple of 128."""
    N, H, W, Cin = x_nhwc.shape
    Cout = w_oihw.shape[0]

    xp = jnp.pad(x_nhwc, ((0, 0), (1, 1), (1, 1), (0, 0)), mode="reflect")

    # TODO(synk): im2col replicates the activation 9x in HBM; for large images, accumulate
    # per-tap (M, Cin)@(Cin, Cout) matmuls over an extra grid axis to avoid this blow-up.
    cols = [xp[:, i:i + H, j:j + W, :] for i in range(3) for j in range(3)]
    patches = jnp.concatenate(cols, axis=-1).reshape(N * H * W, 9 * Cin)

    M = N * H * W
    K = 9 * Cin
    Kpad = _round_up(K, 128)
    Cpad = _round_up(Cout, 128)
    TM = min(512, _round_up(M, 8))
    Mpad = _round_up(M, TM)

    patches = jnp.pad(patches, ((0, Mpad - M), (0, Kpad - K))).astype(jnp.bfloat16)
    w2d = jnp.transpose(w_oihw, (2, 3, 1, 0)).reshape(K, Cout)
    w2d = jnp.pad(w2d, ((0, Kpad - K), (0, Cpad - Cout))).astype(jnp.bfloat16)
    b = jnp.pad(bias.astype(jnp.float32), (0, Cpad - Cout)).reshape(1, Cpad)

    out = pl.pallas_call(
        _gemm_bias_kernel,
        out_shape=jax.ShapeDtypeStruct((Mpad, Cpad), jnp.float32),
        grid=(Mpad // TM,),
        in_specs=[
            pl.BlockSpec((TM, Kpad), lambda i: (i, 0)),
            pl.BlockSpec((Kpad, Cpad), lambda i: (0, 0)),
            pl.BlockSpec((1, Cpad), lambda i: (0, 0)),
        ],
        out_specs=pl.BlockSpec((TM, Cpad), lambda i: (i, 0)),
        compiler_params=pltpu.CompilerParams(
            dimension_semantics=("parallel",),
        ),
    )(patches, w2d, b)
    return out[:M].reshape(N, H, W, Cpad)


def instance_norm_prelu(y_nhwc_pad, slope):
    N, H, W, Cpad = y_nhwc_pad.shape
    y3 = y_nhwc_pad.reshape(N, H * W, Cpad)
    slope_arr = jnp.reshape(slope, (1,)).astype(jnp.float32)
    out = pl.pallas_call(
        _inorm_prelu_kernel,
        out_shape=jax.ShapeDtypeStruct((N, H * W, Cpad), jnp.float32),
        grid=(N,),
        in_specs=[
            pl.BlockSpec(memory_space=pltpu.MemorySpace.SMEM),   # PReLU slope scalar
            pl.BlockSpec((1, H * W, Cpad), lambda n: (n, 0, 0)),
        ],
        out_specs=pl.BlockSpec((1, H * W, Cpad), lambda n: (n, 0, 0)),
        compiler_params=pltpu.CompilerParams(dimension_semantics=("parallel",)),
    )(slope_arr, y3)
    return out.reshape(N, H, W, Cpad)


def instance_norm_residual(y_nhwc_pad, res_nhwc_pad):
    N, H, W, Cpad = y_nhwc_pad.shape
    y3 = y_nhwc_pad.reshape(N, H * W, Cpad)
    r3 = res_nhwc_pad.reshape(N, H * W, Cpad)
    out = pl.pallas_call(
        _inorm_residual_kernel,
        out_shape=jax.ShapeDtypeStruct((N, H * W, Cpad), jnp.float32),
        grid=(N,),
        in_specs=[
            pl.BlockSpec((1, H * W, Cpad), lambda n: (n, 0, 0)),
            pl.BlockSpec((1, H * W, Cpad), lambda n: (n, 0, 0)),
        ],
        out_specs=pl.BlockSpec((1, H * W, Cpad), lambda n: (n, 0, 0)),
        compiler_params=pltpu.CompilerParams(dimension_semantics=("parallel",)),
    )(y3, r3)
    return out.reshape(N, H, W, Cpad)


# --------------------------------------------------------------------------- forward
def resnet_block_forward(params, x_nchw):
    x = jnp.transpose(x_nchw, (0, 2, 3, 1)).astype(jnp.float32)  # NCHW -> NHWC
    N, H, W, C = x.shape
    Cpad = _round_up(C, 128)

    # conv1 -> InstanceNorm -> PReLU
    y1 = conv3x3_reflect(x, params["w1"], params["b1"])          # (N,H,W,Cpad) f32
    h1 = instance_norm_prelu(y1, params["prelu"])[..., :C]       # back to dim channels

    # conv2 -> InstanceNorm -> residual add
    # (use_dropout=False; train-mode Dropout(0.5) not implemented)
    y2 = conv3x3_reflect(h1, params["w2"], params["b2"])         # (N,H,W,Cpad) f32
    x_pad = jnp.pad(x, ((0, 0), (0, 0), (0, 0), (0, Cpad - C)))
    out = instance_norm_residual(y2, x_pad)[..., :C]

    return jnp.transpose(out, (0, 3, 1, 2)).astype(x_nchw.dtype)  # NHWC -> NCHW


# --------------------------------------------------------------------------- reference (numpy, f64)
def _reference_forward(x_nchw, w1, b1, w2, b2, slope):
    x = np.asarray(x_nchw, np.float64)
    w1 = np.asarray(w1, np.float64); b1 = np.asarray(b1, np.float64)
    w2 = np.asarray(w2, np.float64); b2 = np.asarray(b2, np.float64)

    def conv(xin, w, b):
        n, c, h, wd = xin.shape
        xp = np.pad(xin, ((0, 0), (0, 0), (1, 1), (1, 1)), mode="reflect")
        out = np.zeros((n, w.shape[0], h, wd), np.float64)
        for i in range(3):
            for j in range(3):
                out += np.einsum("nchw,oc->nohw", xp[:, :, i:i + h, j:j + wd], w[:, :, i, j])
        return out + b[None, :, None, None]

    def inorm(y):
        mean = y.mean(axis=(2, 3), keepdims=True)
        var = y.var(axis=(2, 3), keepdims=True)
        return (y - mean) / np.sqrt(var + EPS)

    h = conv(x, w1, b1)
    h = inorm(h)
    h = np.where(h >= 0.0, h, float(slope) * h)
    h = conv(h, w2, b2)
    h = inorm(h)
    return x + h


# --------------------------------------------------------------------------- main
if __name__ == "__main__":
    key = jax.random.PRNGKey(0)
    k_x, k_w1, k_b1, k_w2, k_b2 = jax.random.split(key, 5)

    N, dim, H, W = 2, 32, 16, 16
    fan_in = dim * 3 * 3
    bound = 1.0 / np.sqrt(fan_in)

    params = {
        "w1": jax.random.uniform(k_w1, (dim, dim, 3, 3), jnp.float32, -bound, bound),
        "b1": jax.random.uniform(k_b1, (dim,), jnp.float32, -bound, bound),
        "w2": jax.random.uniform(k_w2, (dim, dim, 3, 3), jnp.float32, -bound, bound),
        "b2": jax.random.uniform(k_b2, (dim,), jnp.float32, -bound, bound),
        "prelu": jnp.float32(0.25),  # nn.PReLU() default single-parameter init
    }

    x = jax.random.normal(k_x, (N, dim, H, W), jnp.float32)  # NCHW like PyTorch

    forward = jax.jit(resnet_block_forward)
    out = forward(params, x)
    out = jax.block_until_ready(out)

    ref = _reference_forward(x, params["w1"], params["b1"],
                             params["w2"], params["b2"], params["prelu"])
    max_diff = float(np.max(np.abs(np.asarray(out, np.float64) - ref)))
    if not np.isfinite(max_diff) or max_diff > 0.1:   # bf16 matmul operands -> loose tol
        raise RuntimeError(f"mismatch vs reference: max|diff|={max_diff}")

    print("KERNEL_OK")
</pallas_src>

<mosaic_0001>
module attributes {stable_mosaic.version = 11 : i64} {
  func.func @_gemm_bias_kernel(%arg0: i32, %arg1: memref<512x384xbf16, #tpu.memory_space<vmem>>, %arg2: memref<384x128xbf16, #tpu.memory_space<vmem>>, %arg3: memref<1x128xf32, #tpu.memory_space<vmem>>, %arg4: memref<512x128xf32, #tpu.memory_space<vmem>>) attributes {dimension_semantics = [#tpu.dimension_semantics<parallel>], iteration_bounds = array<i64: 1>, scalar_prefetch = 0 : i64, scratch_operands = 0 : i64, tpu.core_type = #tpu.core_type<tc>, window_params = [{transform_indices = @transform_0, window_bounds = array<i64: 512, 384>}, {pipeline_mode = #tpu.pipeline_mode<synchronous>, transform_indices = @transform_1, window_bounds = array<i64: 384, 128>}, {pipeline_mode = #tpu.pipeline_mode<synchronous>, transform_indices = @transform_2, window_bounds = array<i64: 1, 128>}, {transform_indices = @transform_3, window_bounds = array<i64: 512, 128>}]} {
    %c0 = arith.constant 0 : index
    %c0_0 = arith.constant 0 : index
    %0 = vector.load %arg1[%c0, %c0_0] : memref<512x384xbf16, #tpu.memory_space<vmem>>, vector<512x384xbf16>
    %c0_1 = arith.constant 0 : index
    %c0_2 = arith.constant 0 : index
    %1 = vector.load %arg2[%c0_1, %c0_2] : memref<384x128xbf16, #tpu.memory_space<vmem>>, vector<384x128xbf16>
    %cst = arith.constant dense<0.000000e+00> : vector<512x128xf32>
    %2 = tpu.matmul %0, %1, %cst {dimension_numbers = #tpu.dot_dimension_numbers<[1], [0], [0], [1], [0, 0, 1, 1], [], []>} : vector<512x384xbf16>, vector<384x128xbf16>, vector<512x128xf32> -> vector<512x128xf32>
    %c0_3 = arith.constant 0 : index
    %c0_4 = arith.constant 0 : index
    %3 = vector.load %arg3[%c0_3, %c0_4] : memref<1x128xf32, #tpu.memory_space<vmem>>, vector<1x128xf32>
    %4 = vector.broadcast %3 : vector<1x128xf32> to vector<512x128xf32>
    %5 = arith.addf %2, %4 : vector<512x128xf32>
    %c0_5 = arith.constant 0 : index
    %c0_6 = arith.constant 0 : index
    %6 = vector.load %arg4[%c0_5, %c0_6] : memref<512x128xf32, #tpu.memory_space<vmem>>, vector<512x128xf32>
    tpu.vector_store %arg4[%c0_5, %c0_6], %5 {strides = array<i32>} : memref<512x128xf32, #tpu.memory_space<vmem>>, vector<512x128xf32>,
    return
  }
  func.func @transform_0(%arg0: i32) -> (i32, i32) {
    %c0_i32 = arith.constant 0 : i32
    %c0_i32_0 = arith.constant 0 : i32
    return %arg0, %c0_i32 : i32, i32
  }
  func.func @transform_1(%arg0: i32) -> (i32, i32) {
    %c0_i32 = arith.constant 0 : i32
    %c0_i32_0 = arith.constant 0 : i32
    %c0_i32_1 = arith.constant 0 : i32
    return %c0_i32, %c0_i32_0 : i32, i32
  }
  func.func @transform_2(%arg0: i32) -> (i32, i32) {
    %c0_i32 = arith.constant 0 : i32
    %c0_i32_0 = arith.constant 0 : i32
    %c0_i32_1 = arith.constant 0 : i32
    return %c0_i32, %c0_i32_0 : i32, i32
  }
  func.func @transform_3(%arg0: i32) -> (i32, i32) {
    %c0_i32 = arith.constant 0 : i32
    %c0_i32_0 = arith.constant 0 : i32
    return %arg0, %c0_i32 : i32, i32
  }
}

module attributes {stable_mosaic.version = 11 : i64} {
  func.func @_inorm_prelu_kernel(%arg0: i32, %arg1: memref<1xf32, #tpu.memory_space<smem>>, %arg2: memref<1x256x128xf32, #tpu.memory_space<vmem>>, %arg3: memref<1x256x128xf32, #tpu.memory_space<vmem>>) attributes {dimension_semantics = [#tpu.dimension_semantics<parallel>], iteration_bounds = array<i64: 2>, scalar_prefetch = 0 : i64, scratch_operands = 0 : i64, tpu.core_type = #tpu.core_type<tc>, window_params = [{transform_indices = @transform_0, window_bounds = array<i64: 1>}, {transform_indices = @transform_1, window_bounds = array<i64: 1, 256, 128>}, {transform_indices = @transform_2, window_bounds = array<i64: 1, 256, 128>}]} {
    %c0 = arith.constant 0 : index
    %c0_0 = arith.constant 0 : index
    %c0_1 = arith.constant 0 : index
    %0 = vector.load %arg2[%c0, %c0_0, %c0_1] : memref<1x256x128xf32, #tpu.memory_space<vmem>>, vector<1x256x128xf32>
    %cst = arith.constant dense<0.000000e+00> : vector<1x128xf32>
    %1 = vector.multi_reduction <add>, %0, %cst [1] : vector<1x256x128xf32> to vector<1x128xf32>
    %2 = vector.shape_cast %1 : vector<1x128xf32> to vector<1x1x128xf32>
    %cst_2 = arith.constant 2.560000e+02 : f32
    %3 = vector.broadcast %cst_2 : f32 to vector<1x1x128xf32>
    %4 = arith.divf %2, %3 : vector<1x1x128xf32>
    %5 = vector.broadcast %4 : vector<1x1x128xf32> to vector<1x256x128xf32>
    %6 = arith.subf %0, %5 : vector<1x256x128xf32>
    %7 = arith.mulf %6, %6 : vector<1x256x128xf32>
    %cst_3 = arith.constant dense<0.000000e+00> : vector<1x128xf32>
    %8 = vector.multi_reduction <add>, %7, %cst_3 [1] : vector<1x256x128xf32> to vector<1x128xf32>
    %9 = vector.shape_cast %8 : vector<1x128xf32> to vector<1x1x128xf32>
    %cst_4 = arith.constant 2.560000e+02 : f32
    %10 = vector.broadcast %cst_4 : f32 to vector<1x1x128xf32>
    %11 = arith.divf %9, %10 : vector<1x1x128xf32>
    %12 = vector.broadcast %4 : vector<1x1x128xf32> to vector<1x256x128xf32>
    %13 = arith.subf %0, %12 : vector<1x256x128xf32>
    %cst_5 = arith.constant 9.99999974E-6 : f32
    %14 = vector.broadcast %cst_5 : f32 to vector<1x1x128xf32>
    %15 = arith.addf %11, %14 : vector<1x1x128xf32>
    %16 = math.rsqrt %15 : vector<1x1x128xf32>
    %17 = vector.broadcast %16 : vector<1x1x128xf32> to vector<1x256x128xf32>
    %18 = arith.mulf %13, %17 : vector<1x256x128xf32>
    %c0_6 = arith.constant 0 : index
    %19 = memref.load %arg1[%c0_6] : memref<1xf32, #tpu.memory_space<smem>>
    %cst_7 = arith.constant 0.000000e+00 : f32
    %20 = vector.broadcast %cst_7 : f32 to vector<1x256x128xf32>
    %21 = arith.cmpf oge, %18, %20 : vector<1x256x128xf32>
    %22 = vector.broadcast %19 : f32 to vector<1x256x128xf32>
    %23 = arith.mulf %22, %18 : vector<1x256x128xf32>
    %24 = arith.select %21, %18, %23 : vector<1x256x128xi1>, vector<1x256x128xf32>
    %c0_8 = arith.constant 0 : index
    %c0_9 = arith.constant 0 : index
    %c0_10 = arith.constant 0 : index
    %25 = vector.load %arg3[%c0_8, %c0_9, %c0_10] : memref<1x256x128xf32, #tpu.memory_space<vmem>>, vector<1x256x128xf32>
    tpu.vector_store %arg3[%c0_8, %c0_9, %c0_10], %24 {strides = array<i32>} : memref<1x256x128xf32, #tpu.memory_space<vmem>>, vector<1x256x128xf32>,
    return
  }
  func.func @transform_0(%arg0: i32) -> i32 {
    %c0_i32 = arith.constant 0 : i32
    %c0_i32_0 = arith.constant 0 : i32
    return %c0_i32 : i32
  }
  func.func @transform_1(%arg0: i32) -> (i32, i32, i32) {
    %c0_i32 = arith.constant 0 : i32
    %c0_i32_0 = arith.constant 0 : i32
    %c0_i32_1 = arith.constant 0 : i32
    return %arg0, %c0_i32, %c0_i32_0 : i32, i32, i32
  }
  func.func @transform_2(%arg0: i32) -> (i32, i32, i32) {
    %c0_i32 = arith.constant 0 : i32
    %c0_i32_0 = arith.constant 0 : i32
    %c0_i32_1 = arith.constant 0 : i32
    return %arg0, %c0_i32, %c0_i32_0 : i32, i32, i32
  }
}

module attributes {stable_mosaic.version = 11 : i64} {
  func.func @_inorm_residual_kernel(%arg0: i32, %arg1: memref<1x256x128xf32, #tpu.memory_space<vmem>>, %arg2: memref<1x256x128xf32, #tpu.memory_space<vmem>>, %arg3: memref<1x256x128xf32, #tpu.memory_space<vmem>>) attributes {dimension_semantics = [#tpu.dimension_semantics<parallel>], iteration_bounds = array<i64: 2>, scalar_prefetch = 0 : i64, scratch_operands = 0 : i64, tpu.core_type = #tpu.core_type<tc>, window_params = [{transform_indices = @transform_0, window_bounds = array<i64: 1, 256, 128>}, {transform_indices = @transform_1, window_bounds = array<i64: 1, 256, 128>}, {transform_indices = @transform_2, window_bounds = array<i64: 1, 256, 128>}]} {
    %c0 = arith.constant 0 : index
    %c0_0 = arith.constant 0 : index
    %c0_1 = arith.constant 0 : index
    %0 = vector.load %arg1[%c0, %c0_0, %c0_1] : memref<1x256x128xf32, #tpu.memory_space<vmem>>, vector<1x256x128xf32>
    %cst = arith.constant dense<0.000000e+00> : vector<1x128xf32>
    %1 = vector.multi_reduction <add>, %0, %cst [1] : vector<1x256x128xf32> to vector<1x128xf32>
    %2 = vector.shape_cast %1 : vector<1x128xf32> to vector<1x1x128xf32>
    %cst_2 = arith.constant 2.560000e+02 : f32
    %3 = vector.broadcast %cst_2 : f32 to vector<1x1x128xf32>
    %4 = arith.divf %2, %3 : vector<1x1x128xf32>
    %5 = vector.broadcast %4 : vector<1x1x128xf32> to vector<1x256x128xf32>
    %6 = arith.subf %0, %5 : vector<1x256x128xf32>
    %7 = arith.mulf %6, %6 : vector<1x256x128xf32>
    %cst_3 = arith.constant dense<0.000000e+00> : vector<1x128xf32>
    %8 = vector.multi_reduction <add>, %7, %cst_3 [1] : vector<1x256x128xf32> to vector<1x128xf32>
    %9 = vector.shape_cast %8 : vector<1x128xf32> to vector<1x1x128xf32>
    %cst_4 = arith.constant 2.560000e+02 : f32
    %10 = vector.broadcast %cst_4 : f32 to vector<1x1x128xf32>
    %11 = arith.divf %9, %10 : vector<1x1x128xf32>
    %12 = vector.broadcast %4 : vector<1x1x128xf32> to vector<1x256x128xf32>
    %13 = arith.subf %0, %12 : vector<1x256x128xf32>
    %cst_5 = arith.constant 9.99999974E-6 : f32
    %14 = vector.broadcast %cst_5 : f32 to vector<1x1x128xf32>
    %15 = arith.addf %11, %14 : vector<1x1x128xf32>
    %16 = math.rsqrt %15 : vector<1x1x128xf32>
    %17 = vector.broadcast %16 : vector<1x1x128xf32> to vector<1x256x128xf32>
    %18 = arith.mulf %13, %17 : vector<1x256x128xf32>
    %c0_6 = arith.constant 0 : index
    %c0_7 = arith.constant 0 : index
    %c0_8 = arith.constant 0 : index
    %19 = vector.load %arg2[%c0_6, %c0_7, %c0_8] : memref<1x256x128xf32, #tpu.memory_space<vmem>>, vector<1x256x128xf32>
    %20 = arith.addf %19, %18 : vector<1x256x128xf32>
    %c0_9 = arith.constant 0 : index
    %c0_10 = arith.constant 0 : index
    %c0_11 = arith.constant 0 : index
    %21 = vector.load %arg3[%c0_9, %c0_10, %c0_11] : memref<1x256x128xf32, #tpu.memory_space<vmem>>, vector<1x256x128xf32>
    tpu.vector_store %arg3[%c0_9, %c0_10, %c0_11], %20 {strides = array<i32>} : memref<1x256x128xf32, #tpu.memory_space<vmem>>, vector<1x256x128xf32>,
    return
  }
  func.func @transform_0(%arg0: i32) -> (i32, i32, i32) {
    %c0_i32 = arith.constant 0 : i32
    %c0_i32_0 = arith.constant 0 : i32
    %c0_i32_1 = arith.constant 0 : i32
    return %arg0, %c0_i32, %c0_i32_0 : i32, i32, i32
  }
  func.func @transform_1(%arg0: i32) -> (i32, i32, i32) {
    %c0_i32 = arith.constant 0 : i32
    %c0_i32_0 = arith.constant 0 : i32
    %c0_i32_1 = arith.constant 0 : i32
    return %arg0, %c0_i32, %c0_i32_0 : i32, i32, i32
  }
  func.func @transform_2(%arg0: i32) -> (i32, i32, i32) {
    %c0_i32 = arith.constant 0 : i32
    %c0_i32_0 = arith.constant 0 : i32
    %c0_i32_1 = arith.constant 0 : i32
    return %arg0, %c0_i32, %c0_i32_0 : i32, i32, i32
  }
}

</mosaic_0001>

<llo_original>
// kernel: resnet_block_forward.5
$region0: #{resnet_block_forward.5}
  #allocation0 [shape = 'u32[]', space=smem, size = 0x4, offset = 0x4, fixed_abs, tag = 'smem constant byte address 0x4 - core index']
  #allocation1 [shape = 'u32[72,128]{1,0:T(1,128)}', space=vmem, size = 0x9000, scoped, tag = 'internal scratch']
  #allocation2 [shape = 'f32[1]{0:T(128)S(6)}', space=smem, size = 0x200, scoped, tag = 'scoped memory for resnet_block_forward.5']
  %s0 = inlined_call_operand.<no memory space> [shape: f32[1], index: 0, kind: input, shape index: {}]
  %s1 = inlined_call_operand.vmem [shape: f32[2,256,128], index: 1, kind: input, shape index: {}]
  %s2 = inlined_call_operand.vmem [shape: f32[2,256,128], index: 2, kind: output, shape index: {}]
  %s3 = sld [smem:[#allocation0]]
  $region41: #{resnet_block_forward.5} parent=0
    _
  %s5 = ssub.s32 1, %s3
  %s6 = scalar_select 0, %s5, %s3
  %7 = sst [smem:[#allocation2]] %s0
  loop: start=0, step=1, limit=4
  $region2: #{resnet_block_forward.5} parent=0 // loop_pre_header
    _
  $region3: #{resnet_block_forward.5} parent=0 // loop_header
    %s9 = sphi 0, %s13
    %p10 = scmp.ge.s32.totalorder %s9, 4
    %s17 = sphi 0, %s17
    %s19 = sphi 0, %s17
    %s20 = sphi 0, %s19
    %s34 = sphi 0, %s20
    %s40 = sphi 0, %s42
    %s43 = sphi 0, %s40
    %s44 = sphi 0, %s43
    %s60 = sphi 0, %s44
    %s66 = sphi 0, %s68
    %s69 = sphi 0, %s66
    %s70 = sphi 0, %s69
    %s86 = sphi 0, %s70
  $region4: #{resnet_block_forward.5} parent=0 // loop_header_branch
    %12 = sbr.rel (%p10) target = $region8
  $region5: #{resnet_block_forward.5} parent=0 // loop_body
    %s14 = ssub.s32 %s9, 1
    %s15 = ssub.s32 %s9, 2
    %s16 = sadd.s32 %s9, 1
    %s18 = sadd.s32 %s17, 1
    %p21 = scmp.eq.s32.totalorder %s9, 1
    %p22 = scmp.ne.s32.totalorder %s17, %s19
    %p23 = scmp.eq.s32.totalorder %s9, 0
    %p24 = por %p22, %p23
    %p25 = scmp.ne.s32.totalorder %s17, %s19
    %p26 = scmp.eq.s32.totalorder %s14, 1
    %p27 = por %p25, %p26
    %p28 = scmp.ne.s32.totalorder %s19, %s20
    %p29 = scmp.eq.s32.totalorder %s14, 0
    %p30 = por %p28, %p29
    %p31 = scmp.ne.s32.totalorder %s19, %s20
    %p32 = scmp.eq.s32.totalorder %s15, 1
    %p33 = por %p31, %p32
    %p35 = scmp.ne.s32.totalorder %s20, %s34
    %p36 = scmp.eq.s32.totalorder %s15, 0
    %p37 = por %p35, %p36
    %s38 = ssub.s32 %s9, %s16
    %p39 = scmp.eq.s32.totalorder %s38, 0
    %s41 = sadd.s32 %s40, 1
    %s42 = scalar_select %p39, %s40, %s41
    %p45 = pneg %p39
    %p46 = scmp.eq.s32.totalorder %s9, 1
    %p47 = por %p45, %p46
    %p48 = scmp.ne.s32.totalorder %s40, %s43
    %p49 = scmp.eq.s32.totalorder %s9, 0
    %p50 = por %p48, %p49
    %p51 = scmp.ne.s32.totalorder %s40, %s43
    %p52 = scmp.eq.s32.totalorder %s14, 1
    %p53 = por %p51, %p52
    %p54 = scmp.ne.s32.totalorder %s43, %s44
    %p55 = scmp.eq.s32.totalorder %s14, 0
    %p56 = por %p54, %p55
    %p57 = scmp.ne.s32.totalorder %s43, %s44
    %p58 = scmp.eq.s32.totalorder %s15, 1
    %p59 = por %p57, %p58
    %p61 = scmp.ne.s32.totalorder %s44, %s60
    %p62 = scmp.eq.s32.totalorder %s15, 0
    %p63 = por %p61, %p62
    %s64 = ssub.s32 %s9, %s16
    %p65 = scmp.eq.s32.totalorder %s64, 0
    %s67 = sadd.s32 %s66, 1
    %s68 = scalar_select %p65, %s66, %s67
    %p71 = pneg %p65
    %p72 = scmp.eq.s32.totalorder %s9, 1
    %p73 = por %p71, %p72
    %p74 = scmp.ne.s32.totalorder %s66, %s69
    %p75 = scmp.eq.s32.totalorder %s9, 0
    %p76 = por %p74, %p75
    %p77 = scmp.ne.s32.totalorder %s66, %s69
    %p78 = scmp.eq.s32.totalorder %s14, 1
    %p79 = por %p77, %p78
    %p80 = scmp.ne.s32.totalorder %s69, %s70
    %p81 = scmp.eq.s32.totalorder %s14, 0
    %p82 = por %p80, %p81
    %p83 = scmp.ne.s32.totalorder %s69, %s70
    %p84 = scmp.eq.s32.totalorder %s15, 1
    %p85 = por %p83, %p84
    %p87 = scmp.ne.s32.totalorder %s70, %s86
    %p88 = scmp.eq.s32.totalorder %s15, 0
    %p89 = por %p87, %p88
    %p90 = scmp.le.s32.totalorder 1, %s9
    %p91 = scmp.lt.s32.totalorder %s9, 3
    %p92 = pnand %p90, %p91
    %p93 = pneg %p92
    // Predicated region
    $region9: #{resnet_block_forward.5} parent=5 // pred_check
      _
    $region10: #{resnet_block_forward.5} parent=5 // pred_check_branch
      %95 = sbr.rel (%p92) target = $region12
    $region11: #{resnet_block_forward.5} parent=5 // pred_region
      %s96 = ssub.s32 %s9, 1
      // Predicated region
      $region13: #{resnet_block_forward.5} parent=11 // pred_check
        %p97 = pneg %p30
      $region14: #{resnet_block_forward.5} parent=11 // pred_check_branch
        %99 = sbr.rel (%p97) target = $region16
      $region15: #{resnet_block_forward.5} parent=11 // pred_region
        _
      $region16: #{resnet_block_forward.5} parent=11 // pred_fallthru
        _
    $region12: #{resnet_block_forward.5} parent=5 // pred_fallthru
      _
    %p100 = scmp.lt.s32.totalorder %s9, 2
    // Predicated region
    $region17: #{resnet_block_forward.5} parent=5 // pred_check
      %p101 = pneg %p100
    $region18: #{resnet_block_forward.5} parent=5 // pred_check_branch
      %103 = sbr.rel (%p101) target = $region20
    $region19: #{resnet_block_forward.5} parent=5 // pred_region
      // Predicated region
      $region21: #{resnet_block_forward.5} parent=19 // pred_check
        %p104 = pneg %p50
      $region22: #{resnet_block_forward.5} parent=19 // pred_check_branch
        %106 = sbr.rel (%p104) target = $region24
      $region23: #{resnet_block_forward.5} parent=19 // pred_region
        %p107 = scmp.lt.s32.totalorder %s9, 1
        %s108 = scalar_select %p107, %s9, 1
        %s109 = smul.addr %s108, 32
        %s110 = smul.addr %s109, 8
        %s111 = scalar_lea.vmem %s1, %s110
      $region24: #{resnet_block_forward.5} parent=19 // pred_fallthru
        _
    $region20: #{resnet_block_forward.5} parent=5 // pred_fallthru
      _
    %p112 = scmp.le.s32.totalorder 1, %s9
    %p113 = scmp.lt.s32.totalorder %s9, 3
    %p114 = pnand %p112, %p113
    %p115 = pneg %p114
    // Predicated region
    $region25: #{resnet_block_forward.5} parent=5 // pred_check
      _
    $region26: #{resnet_block_forward.5} parent=5 // pred_check_branch
      %117 = sbr.rel (%p114) target = $region28
    $region27: #{resnet_block_forward.5} parent=5 // pred_region
      %s118 = ssub.s32 %s9, 1
      %p119 = pneg %p30
      %p120 = pneg %p27
      %p121 = scmp.lt.s32.totalorder %s14, 1
      %s122 = scalar_select %p121, %s14, 1
      %s123 = smul.addr %s122, 32
      %s124 = smul.addr %s123, 8
      %s125 = scalar_lea.vmem %s1, %s124
      %p126 = pneg %p56
      %p127 = pneg %p53
      %p128 = pneg %p82
      %p129 = pneg %p79
      %p130 = scmp.lt.s32.totalorder %s14, 1
      %s131 = scalar_select %p130, %s14, 1
      %s132 = smul.addr %s131, 32
      %s133 = smul.addr %s132, 8
      %s134 = scalar_lea.vmem %s2, %s133
      %p135 = scmp.lt.s32.totalorder %s14, 1
      %s136 = scalar_select %p135, %s14, 1
      %s137 = smul.addr %s136, 32
      %s138 = smul.addr %s137, 8
      %s139 = scalar_lea.vmem %s1, %s138
      %p140 = scmp.lt.s32.totalorder %s14, 1
      %s141 = scalar_select %p140, %s14, 1
      %s142 = smul.addr %s141, 32
      %s143 = smul.addr %s142, 8
      %s144 = scalar_lea.vmem %s2, %s143
      %v145 = vld [vmem:[%s139] sm:$0xff]
      %v146 = vld [vmem:[%s139 + $0x8] sm:$0xff]
      %v147 = vld [vmem:[%s139 + $0x10] sm:$0xff]
      %v148 = vld [vmem:[%s139 + $0x18] sm:$0xff]
      %v149 = vld [vmem:[%s139 + $0x20] sm:$0xff]
      %v150 = vld [vmem:[%s139 + $0x28] sm:$0xff]
      %v151 = vld [vmem:[%s139 + $0x30] sm:$0xff]
      %v152 = vld [vmem:[%s139 + $0x38] sm:$0xff]
      %v153 = vld [vmem:[%s139 + $0x40] sm:$0xff]
      %v154 = vld [vmem:[%s139 + $0x48] sm:$0xff]
      %v155 = vld [vmem:[%s139 + $0x50] sm:$0xff]
      %v156 = vld [vmem:[%s139 + $0x58] sm:$0xff]
      %v157 = vld [vmem:[%s139 + $0x60] sm:$0xff]
      %v158 = vld [vmem:[%s139 + $0x68] sm:$0xff]
      %v159 = vld [vmem:[%s139 + $0x70] sm:$0xff]
      %v160 = vld [vmem:[%s139 + $0x78] sm:$0xff]
      %v161 = vld [vmem:[%s139 + $0x80] sm:$0xff]
      %v162 = vld [vmem:[%s139 + $0x88] sm:$0xff]
      %v163 = vld [vmem:[%s139 + $0x90] sm:$0xff]
      %v164 = vld [vmem:[%s139 + $0x98] sm:$0xff]
      %v165 = vld [vmem:[%s139 + $0xa0] sm:$0xff]
      %v166 = vld [vmem:[%s139 + $0xa8] sm:$0xff]
      %v167 = vld [vmem:[%s139 + $0xb0] sm:$0xff]
      %v168 = vld [vmem:[%s139 + $0xb8] sm:$0xff]
      %v169 = vld [vmem:[%s139 + $0xc0] sm:$0xff]
      %v170 = vld [vmem:[%s139 + $0xc8] sm:$0xff]
      %v171 = vld [vmem:[%s139 + $0xd0] sm:$0xff]
      %v172 = vld [vmem:[%s139 + $0xd8] sm:$0xff]
      %v173 = vld [vmem:[%s139 + $0xe0] sm:$0xff]
      %v174 = vld [vmem:[%s139 + $0xe8] sm:$0xff]
      %v175 = vld [vmem:[%s139 + $0xf0] sm:$0xff]
      %v176 = vld [vmem:[%s139 + $0xf8] sm:$0xff]
      %v177 = vadd.f32 %v145, %v146
      %v178 = vadd.f32 %v177, %v147
      %v179 = vadd.f32 %v178, %v148
      %v180 = vadd.f32 %v179, %v149
      %v181 = vadd.f32 %v180, %v150
      %v182 = vadd.f32 %v181, %v151
      %v183 = vadd.f32 %v182, %v152
      %v184 = vadd.f32 %v183, %v153
      %v185 = vadd.f32 %v184, %v154
      %v186 = vadd.f32 %v185, %v155
      %v187 = vadd.f32 %v186, %v156
      %v188 = vadd.f32 %v187, %v157
      %v189 = vadd.f32 %v188, %v158
      %v190 = vadd.f32 %v189, %v159
      %v191 = vadd.f32 %v190, %v160
      %v192 = vadd.f32 %v191, %v161
      %v193 = vadd.f32 %v192, %v162
      %v194 = vadd.f32 %v193, %v163
      %v195 = vadd.f32 %v194, %v164
      %v196 = vadd.f32 %v195, %v165
      %v197 = vadd.f32 %v196, %v166
      %v198 = vadd.f32 %v197, %v167
      %v199 = vadd.f32 %v198, %v168
      %v200 = vadd.f32 %v199, %v169
      %v201 = vadd.f32 %v200, %v170
      %v202 = vadd.f32 %v201, %v171
      %v203 = vadd.f32 %v202, %v172
      %v204 = vadd.f32 %v203, %v173
      %v205 = vadd.f32 %v204, %v174
      %v206 = vadd.f32 %v205, %v175
      %v207 = vadd.f32 %v206, %v176
      %v208 = vrot.slane %v207, 4
      %v209 = vadd.f32 %v207, %v208
      %v210 = vrot.slane %v209, 2
      %v211 = vadd.f32 %v209, %v210
      %v212 = vrot.slane %v211, 1
      %v213 = vadd.f32 %v211, %v212
      %v214 = vrcp.pop 256.0
      %v215 = vmul.f32 256.0, %v214
      %v216 = vsub.f32 1.0, %v215
      %v217 = vmul.f32 %v214, %v216
      %v218 = vadd.f32 %v214, %v217
      %vm219 = vweird.f32 %v214
      %v220 = vsel %vm219, %v214, %v218
      %v221 = vmul.f32 %v213, %v220
      %v222 = vsub.f32 %v145, %v221
      %v223 = vsub.f32 %v146, %v221
      %v224 = vsub.f32 %v147, %v221
      %v225 = vsub.f32 %v148, %v221
      %v226 = vsub.f32 %v149, %v221
      %v227 = vsub.f32 %v150, %v221
      %v228 = vsub.f32 %v151, %v221
      %v229 = vsub.f32 %v152, %v221
      %v230 = vsub.f32 %v153, %v221
      %v231 = vsub.f32 %v154, %v221
      %v232 = vsub.f32 %v155, %v221
      %v233 = vsub.f32 %v156, %v221
      %v234 = vsub.f32 %v157, %v221
      %v235 = vsub.f32 %v158, %v221
      %v236 = vsub.f32 %v159, %v221
      %v237 = vsub.f32 %v160, %v221
      %v238 = vsub.f32 %v161, %v221
      %v239 = vsub.f32 %v162, %v221
      %v240 = vsub.f32 %v163, %v221
      %v241 = vsub.f32 %v164, %v221
      %v242 = vsub.f32 %v165, %v221
      %v243 = vsub.f32 %v166, %v221
      %v244 = vsub.f32 %v167, %v221
      %v245 = vsub.f32 %v168, %v221
      %v246 = vsub.f32 %v169, %v221
      %v247 = vsub.f32 %v170, %v221
      %v248 = vsub.f32 %v171, %v221
      %v249 = vsub.f32 %v172, %v221
      %v250 = vsub.f32 %v173, %v221
      %v251 = vsub.f32 %v174, %v221
      %v252 = vsub.f32 %v175, %v221
      %v253 = vsub.f32 %v176, %v221
      %v254 = vmul.f32 %v222, %v222
      %v255 = vmul.f32 %v223, %v223
      %v256 = vmul.f32 %v224, %v224
      %v257 = vmul.f32 %v225, %v225
      %v258 = vmul.f32 %v226, %v226
      %v259 = vmul.f32 %v227, %v227
      %v260 = vmul.f32 %v228, %v228
      %v261 = vmul.f32 %v229, %v229
      %v262 = vmul.f32 %v230, %v230
      %v263 = vmul.f32 %v231, %v231
      %v264 = vmul.f32 %v232, %v232
      %v265 = vmul.f32 %v233, %v233
      %v266 = vmul.f32 %v234, %v234
      %v267 = vmul.f32 %v235, %v235
      %v268 = vmul.f32 %v236, %v236
      %v269 = vmul.f32 %v237, %v237
      %v270 = vmul.f32 %v238, %v238
      %v271 = vmul.f32 %v239, %v239
      %v272 = vmul.f32 %v240, %v240
      %v273 = vmul.f32 %v241, %v241
      %v274 = vmul.f32 %v242, %v242
      %v275 = vmul.f32 %v243, %v243
      %v276 = vmul.f32 %v244, %v244
      %v277 = vmul.f32 %v245, %v245
      %v278 = vmul.f32 %v246, %v246
      %v279 = vmul.f32 %v247, %v247
      %v280 = vmul.f32 %v248, %v248
      %v281 = vmul.f32 %v249, %v249
      %v282 = vmul.f32 %v250, %v250
      %v283 = vmul.f32 %v251, %v251
      %v284 = vmul.f32 %v252, %v252
      %v285 = vmul.f32 %v253, %v253
      %v286 = vadd.f32 %v254, %v255
      %v287 = vadd.f32 %v286, %v256
      %v288 = vadd.f32 %v287, %v257
      %v289 = vadd.f32 %v288, %v258
      %v290 = vadd.f32 %v289, %v259
      %v291 = vadd.f32 %v290, %v260
      %v292 = vadd.f32 %v291, %v261
      %v293 = vadd.f32 %v292, %v262
      %v294 = vadd.f32 %v293, %v263
      %v295 = vadd.f32 %v294, %v264
      %v296 = vadd.f32 %v295, %v265
      %v297 = vadd.f32 %v296, %v266
      %v298 = vadd.f32 %v297, %v267
      %v299 = vadd.f32 %v298, %v268
      %v300 = vadd.f32 %v299, %v269
      %v301 = vadd.f32 %v300, %v270
      %v302 = vadd.f32 %v301, %v271
      %v303 = vadd.f32 %v302, %v272
      %v304 = vadd.f32 %v303, %v273
      %v305 = vadd.f32 %v304, %v274
      %v306 = vadd.f32 %v305, %v275
      %v307 = vadd.f32 %v306, %v276
      %v308 = vadd.f32 %v307, %v277
      %v309 = vadd.f32 %v308, %v278
      %v310 = vadd.f32 %v309, %v279
      %v311 = vadd.f32 %v310, %v280
      %v312 = vadd.f32 %v311, %v281
      %v313 = vadd.f32 %v312, %v282
      %v314 = vadd.f32 %v313, %v283
      %v315 = vadd.f32 %v314, %v284
      %v316 = vadd.f32 %v315, %v285
      %v317 = vrot.slane %v316, 4
      %v318 = vadd.f32 %v316, %v317
      %v319 = vrot.slane %v318, 2
      %v320 = vadd.f32 %v318, %v319
      %v321 = vrot.slane %v320, 1
      %v322 = vadd.f32 %v320, %v321
      %v323 = vmul.f32 %v322, %v220
      %v324 = vadd.f32 %v323, 1e-05
      %v325 = vrsqrt.pop %v324
      %v326 = vmul.f32 %v325, %v324
      %v327 = vmul.f32 %v326, %v325
      %v328 = vmul.f32 0.5, %v327
      %v329 = vsub.f32 1.5, %v328
      %v330 = vmul.f32 %v325, %v329
      %vm331 = vweird.f32 %v324
      %vm332 = vweird.f32 %v325
      %vm333 = vmor %vm331, %vm332
      %v334 = vsel %vm333, %v325, %v330
      %v335 = vmul.f32 %v222, %v334
      %v336 = vmul.f32 %v223, %v334
      %v337 = vmul.f32 %v224, %v334
      %v338 = vmul.f32 %v225, %v334
      %v339 = vmul.f32 %v226, %v334
      %v340 = vmul.f32 %v227, %v334
      %v341 = vmul.f32 %v228, %v334
      %v342 = vmul.f32 %v229, %v334
      %v343 = vmul.f32 %v230, %v334
      %v344 = vmul.f32 %v231, %v334
      %v345 = vmul.f32 %v232, %v334
      %v346 = vmul.f32 %v233, %v334
      %v347 = vmul.f32 %v234, %v334
      %v348 = vmul.f32 %v235, %v334
      %v349 = vmul.f32 %v236, %v334
      %v350 = vmul.f32 %v237, %v334
      %v351 = vmul.f32 %v238, %v334
      %v352 = vmul.f32 %v239, %v334
      %v353 = vmul.f32 %v240, %v334
      %v354 = vmul.f32 %v241, %v334
      %v355 = vmul.f32 %v242, %v334
      %v356 = vmul.f32 %v243, %v334
      %v357 = vmul.f32 %v244, %v334
      %v358 = vmul.f32 %v245, %v334
      %v359 = vmul.f32 %v246, %v334
      %v360 = vmul.f32 %v247, %v334
      %v361 = vmul.f32 %v248, %v334
      %v362 = vmul.f32 %v249, %v334
      %v363 = vmul.f32 %v250, %v334
      %v364 = vmul.f32 %v251, %v334
      %v365 = vmul.f32 %v252, %v334
      %v366 = vmul.f32 %v253, %v334
      %s367 = sld [smem:[#allocation2]]
      %vm368 = vcmp.ge.f32.partialorder %v335, 0.0
      %vm369 = vcmp.ge.f32.partialorder %v336, 0.0
      %vm370 = vcmp.ge.f32.partialorder %v337, 0.0
      %vm371 = vcmp.ge.f32.partialorder %v338, 0.0
      %vm372 = vcmp.ge.f32.partialorder %v339, 0.0
      %vm373 = vcmp.ge.f32.partialorder %v340, 0.0
      %vm374 = vcmp.ge.f32.partialorder %v341, 0.0
      %vm375 = vcmp.ge.f32.partialorder %v342, 0.0
      %vm376 = vcmp.ge.f32.partialorder %v343, 0.0
      %vm377 = vcmp.ge.f32.partialorder %v344, 0.0
      %vm378 = vcmp.ge.f32.partialorder %v345, 0.0
      %vm379 = vcmp.ge.f32.partialorder %v346, 0.0
      %vm380 = vcmp.ge.f32.partialorder %v347, 0.0
      %vm381 = vcmp.ge.f32.partialorder %v348, 0.0
      %vm382 = vcmp.ge.f32.partialorder %v349, 0.0
      %vm383 = vcmp.ge.f32.partialorder %v350, 0.0
      %vm384 = vcmp.ge.f32.partialorder %v351, 0.0
      %vm385 = vcmp.ge.f32.partialorder %v352, 0.0
      %vm386 = vcmp.ge.f32.partialorder %v353, 0.0
      %vm387 = vcmp.ge.f32.partialorder %v354, 0.0
      %vm388 = vcmp.ge.f32.partialorder %v355, 0.0
      %vm389 = vcmp.ge.f32.partialorder %v356, 0.0
      %vm390 = vcmp.ge.f32.partialorder %v357, 0.0
      %vm391 = vcmp.ge.f32.partialorder %v358, 0.0
      %vm392 = vcmp.ge.f32.partialorder %v359, 0.0
      %vm393 = vcmp.ge.f32.partialorder %v360, 0.0
      %vm394 = vcmp.ge.f32.partialorder %v361, 0.0
      %vm395 = vcmp.ge.f32.partialorder %v362, 0.0
      %vm396 = vcmp.ge.f32.partialorder %v363, 0.0
      %vm397 = vcmp.ge.f32.partialorder %v364, 0.0
      %vm398 = vcmp.ge.f32.partialorder %v365, 0.0
      %vm399 = vcmp.ge.f32.partialorder %v366, 0.0
      %v400 = vstv %s367
      %v401 = vmul.f32 %v400, %v335
      %v402 = vmul.f32 %v400, %v336
      %v403 = vmul.f32 %v400, %v337
      %v404 = vmul.f32 %v400, %v338
      %v405 = vmul.f32 %v400, %v339
      %v406 = vmul.f32 %v400, %v340
      %v407 = vmul.f32 %v400, %v341
      %v408 = vmul.f32 %v400, %v342
      %v409 = vmul.f32 %v400, %v343
      %v410 = vmul.f32 %v400, %v344
      %v411 = vmul.f32 %v400, %v345
      %v412 = vmul.f32 %v400, %v346
      %v413 = vmul.f32 %v400, %v347
      %v414 = vmul.f32 %v400, %v348
      %v415 = vmul.f32 %v400, %v349
      %v416 = vmul.f32 %v400, %v350
      %v417 = vmul.f32 %v400, %v351
      %v418 = vmul.f32 %v400, %v352
      %v419 = vmul.f32 %v400, %v353
      %v420 = vmul.f32 %v400, %v354
      %v421 = vmul.f32 %v400, %v355
      %v422 = vmul.f32 %v400, %v356
      %v423 = vmul.f32 %v400, %v357
      %v424 = vmul.f32 %v400, %v358
      %v425 = vmul.f32 %v400, %v359
      %v426 = vmul.f32 %v400, %v360
      %v427 = vmul.f32 %v400, %v361
      %v428 = vmul.f32 %v400, %v362
      %v429 = vmul.f32 %v400, %v363
      %v430 = vmul.f32 %v400, %v364
      %v431 = vmul.f32 %v400, %v365
      %v432 = vmul.f32 %v400, %v366
      %v433 = vsel %vm368, %v335, %v401
      %v434 = vsel %vm369, %v336, %v402
      %v435 = vsel %vm370, %v337, %v403
      %v436 = vsel %vm371, %v338, %v404
      %v437 = vsel %vm372, %v339, %v405
      %v438 = vsel %vm373, %v340, %v406
      %v439 = vsel %vm374, %v341, %v407
      %v440 = vsel %vm375, %v342, %v408
      %v441 = vsel %vm376, %v343, %v409
      %v442 = vsel %vm377, %v344, %v410
      %v443 = vsel %vm378, %v345, %v411
      %v444 = vsel %vm379, %v346, %v412
      %v445 = vsel %vm380, %v347, %v413
      %v446 = vsel %vm381, %v348, %v414
      %v447 = vsel %vm382, %v349, %v415
      %v448 = vsel %vm383, %v350, %v416
      %v449 = vsel %vm384, %v351, %v417
      %v450 = vsel %vm385, %v352, %v418
      %v451 = vsel %vm386, %v353, %v419
      %v452 = vsel %vm387, %v354, %v420
      %v453 = vsel %vm388, %v355, %v421
      %v454 = vsel %vm389, %v356, %v422
      %v455 = vsel %vm390, %v357, %v423
      %v456 = vsel %vm391, %v358, %v424
      %v457 = vsel %vm392, %v359, %v425
      %v458 = vsel %vm393, %v360, %v426
      %v459 = vsel %vm394, %v361, %v427
      %v460 = vsel %vm395, %v362, %v428
      %v461 = vsel %vm396, %v363, %v429
      %v462 = vsel %vm397, %v364, %v430
      %v463 = vsel %vm398, %v365, %v431
      %v464 = vsel %vm399, %v366, %v432
      %465 = vst [vmem:[%s144] sm:$0xff] %v433
      %466 = vst [vmem:[%s144 + $0x8] sm:$0xff] %v434
      %467 = vst [vmem:[%s144 + $0x10] sm:$0xff] %v435
      %468 = vst [vmem:[%s144 + $0x18] sm:$0xff] %v436
      %469 = vst [vmem:[%s144 + $0x20] sm:$0xff] %v437
      %470 = vst [vmem:[%s144 + $0x28] sm:$0xff] %v438
      %471 = vst [vmem:[%s144 + $0x30] sm:$0xff] %v439
      %472 = vst [vmem:[%s144 + $0x38] sm:$0xff] %v440
      %473 = vst [vmem:[%s144 + $0x40] sm:$0xff] %v441
      %474 = vst [vmem:[%s144 + $0x48] sm:$0xff] %v442
      %475 = vst [vmem:[%s144 + $0x50] sm:$0xff] %v443
      %476 = vst [vmem:[%s144 + $0x58] sm:$0xff] %v444
      %477 = vst [vmem:[%s144 + $0x60] sm:$0xff] %v445
      %478 = vst [vmem:[%s144 + $0x68] sm:$0xff] %v446
      %479 = vst [vmem:[%s144 + $0x70] sm:$0xff] %v447
      %480 = vst [vmem:[%s144 + $0x78] sm:$0xff] %v448
      %481 = vst [vmem:[%s144 + $0x80] sm:$0xff] %v449
      %482 = vst [vmem:[%s144 + $0x88] sm:$0xff] %v450
      %483 = vst [vmem:[%s144 + $0x90] sm:$0xff] %v451
      %484 = vst [vmem:[%s144 + $0x98] sm:$0xff] %v452
      %485 = vst [vmem:[%s144 + $0xa0] sm:$0xff] %v453
      %486 = vst [vmem:[%s144 + $0xa8] sm:$0xff] %v454
      %487 = vst [vmem:[%s144 + $0xb0] sm:$0xff] %v455
      %488 = vst [vmem:[%s144 + $0xb8] sm:$0xff] %v456
      %489 = vst [vmem:[%s144 + $0xc0] sm:$0xff] %v457
      %490 = vst [vmem:[%s144 + $0xc8] sm:$0xff] %v458
      %491 = vst [vmem:[%s144 + $0xd0] sm:$0xff] %v459
      %492 = vst [vmem:[%s144 + $0xd8] sm:$0xff] %v460
      %493 = vst [vmem:[%s144 + $0xe0] sm:$0xff] %v461
      %494 = vst [vmem:[%s144 + $0xe8] sm:$0xff] %v462
      %495 = vst [vmem:[%s144 + $0xf0] sm:$0xff] %v463
      %496 = vst [vmem:[%s144 + $0xf8] sm:$0xff] %v464
      %p497 = scmp.lt.s32.totalorder %s14, 1
      %s498 = scalar_select %p497, %s14, 1
      %s499 = smul.addr %s498, 32
      %s500 = smul.addr %s499, 8
      %s501 = scalar_lea.vmem %s2, %s500
      // Predicated region
      $region29: #{resnet_block_forward.5} parent=27 // pred_check
        %p502 = pneg %p79
      $region30: #{resnet_block_forward.5} parent=27 // pred_check_branch
        %504 = sbr.rel (%p502) target = $region32
      $region31: #{resnet_block_forward.5} parent=27 // pred_region
        _
      $region32: #{resnet_block_forward.5} parent=27 // pred_fallthru
        _
    $region28: #{resnet_block_forward.5} parent=5 // pred_fallthru
      _
    %p505 = scmp.le.s32.totalorder 2, %s9
    // Predicated region
    $region33: #{resnet_block_forward.5} parent=5 // pred_check
      %p506 = pneg %p505
    $region34: #{resnet_block_forward.5} parent=5 // pred_check_branch
      %508 = sbr.rel (%p506) target = $region36
    $region35: #{resnet_block_forward.5} parent=5 // pred_region
      %s509 = ssub.s32 %s9, 2
      // Predicated region
      $region37: #{resnet_block_forward.5} parent=35 // pred_check
        %p510 = pneg %p85
      $region38: #{resnet_block_forward.5} parent=35 // pred_check_branch
        %512 = sbr.rel (%p510) target = $region40
      $region39: #{resnet_block_forward.5} parent=35 // pred_region
        %p513 = scmp.lt.s32.totalorder %s15, 1
        %s514 = scalar_select %p513, %s15, 1
        %s515 = smul.addr %s514, 32
        %s516 = smul.addr %s515, 8
        %s517 = scalar_lea.vmem %s2, %s516
      $region40: #{resnet_block_forward.5} parent=35 // pred_fallthru
        _
    $region36: #{resnet_block_forward.5} parent=5 // pred_fallthru
      _
  $region6: #{resnet_block_forward.5} parent=0 // loop_footer
    %s13 = sadd.s32 1, %s9
  $region7: #{resnet_block_forward.5} parent=0 // loop_footer_branch
    %8 = sbr.rel target = $region3
  $region8: #{resnet_block_forward.5} parent=0 // loop_exit
    _

// kernel: resnet_block_forward.4
$region0: #{resnet_block_forward.4}
  #allocation0 [shape = 'u32[]', space=smem, size = 0x4, offset = 0x4, fixed_abs, tag = 'smem constant byte address 0x4 - core index']
  #allocation1 [shape = 'u32[72,128]{1,0:T(1,128)}', space=vmem, size = 0x9000, scoped, tag = 'internal scratch']
  %s0 = inlined_call_operand.vmem [shape: bf16[512,384], index: 0, kind: input, shape index: {}]
  %s1 = inlined_call_operand.vmem [shape: bf16[384,128], index: 1, kind: input, shape index: {}]
  %s2 = inlined_call_operand.vmem [shape: f32[1,128], index: 2, kind: input, shape index: {}]
  %s3 = inlined_call_operand.vmem [shape: f32[512,128], index: 3, kind: output, shape index: {}]
  %s4 = sld [smem:[#allocation0]]
  $region22: #{resnet_block_forward.4} parent=0
    _
  %s6 = ssub.s32 1, %s4
  %s7 = scalar_select 0, %s6, %s4
  // Predicated region
  $region2: #{resnet_block_forward.4} parent=0 // pred_check
    _
  $region3: #{resnet_block_forward.4} parent=0 // pred_check_branch
    %9 = sbr.rel (0) target = $region5
  $region4: #{resnet_block_forward.4} parent=0 // pred_region
    _
  $region5: #{resnet_block_forward.4} parent=0 // pred_fallthru
    _
  // Predicated region
  $region6: #{resnet_block_forward.4} parent=0 // pred_check
    _
  $region7: #{resnet_block_forward.4} parent=0 // pred_check_branch
    %11 = sbr.rel (0) target = $region9
  $region8: #{resnet_block_forward.4} parent=0 // pred_region
    _
  $region9: #{resnet_block_forward.4} parent=0 // pred_fallthru
    _
  // Predicated region
  $region10: #{resnet_block_forward.4} parent=0 // pred_check
    _
  $region11: #{resnet_block_forward.4} parent=0 // pred_check_branch
    %13 = sbr.rel (0) target = $region13
  $region12: #{resnet_block_forward.4} parent=0 // pred_region
    _
  $region13: #{resnet_block_forward.4} parent=0 // pred_fallthru
    _
  %v14 = vld [vmem:[%s0] sm:$0xff]
  %v15 = vld [vmem:[%s0 + $0x8] sm:$0xf]
  %v16 = vld [vmem:[%s0 + $0xc] sm:$0xff]
  %v17 = vld [vmem:[%s0 + $0x14] sm:$0xf]
  %v18 = vld [vmem:[%s0 + $0x18] sm:$0xff]
  %v19 = vld [vmem:[%s0 + $0x20] sm:$0xf]
  %v20 = vld [vmem:[%s0 + $0x24] sm:$0xff]
  %v21 = vld [vmem:[%s0 + $0x2c] sm:$0xf]
  %v22 = vld [vmem:[%s0 + $0x30] sm:$0xff]
  %v23 = vld [vmem:[%s0 + $0x38] sm:$0xf]
  %v24 = vld [vmem:[%s0 + $0x3c] sm:$0xff]
  %v25 = vld [vmem:[%s0 + $0x44] sm:$0xf]
  %v26 = vld [vmem:[%s0 + $0x48] sm:$0xff]
  %v27 = vld [vmem:[%s0 + $0x50] sm:$0xf]
  %v28 = vld [vmem:[%s0 + $0x54] sm:$0xff]
  %v29 = vld [vmem:[%s0 + $0x5c] sm:$0xf]
  %v30 = vld [vmem:[%s0 + $0x60] sm:$0xff]
  %v31 = vld [vmem:[%s0 + $0x68] sm:$0xf]
  %v32 = vld [vmem:[%s0 + $0x6c] sm:$0xff]
  %v33 = vld [vmem:[%s0 + $0x74] sm:$0xf]
  %v34 = vld [vmem:[%s0 + $0x78] sm:$0xff]
  %v35 = vld [vmem:[%s0 + $0x80] sm:$0xf]
  %v36 = vld [vmem:[%s0 + $0x84] sm:$0xff]
  %v37 = vld [vmem:[%s0 + $0x8c] sm:$0xf]
  %v38 = vld [vmem:[%s0 + $0x90] sm:$0xff]
  %v39 = vld [vmem:[%s0 + $0x98] sm:$0xf]
  %v40 = vld [vmem:[%s0 + $0x9c] sm:$0xff]
  %v41 = vld [vmem:[%s0 + $0xa4] sm:$0xf]
  %v42 = vld [vmem:[%s0 + $0xa8] sm:$0xff]
  %v43 = vld [vmem:[%s0 + $0xb0] sm:$0xf]
  %v44 = vld [vmem:[%s0 + $0xb4] sm:$0xff]
  %v45 = vld [vmem:[%s0 + $0xbc] sm:$0xf]
  %v46 = vld [vmem:[%s0 + $0xc0] sm:$0xff]
  %v47 = vld [vmem:[%s0 + $0xc8] sm:$0xf]
  %v48 = vld [vmem:[%s0 + $0xcc] sm:$0xff]
  %v49 = vld [vmem:[%s0 + $0xd4] sm:$0xf]
  %v50 = vld [vmem:[%s0 + $0xd8] sm:$0xff]
  %v51 = vld [vmem:[%s0 + $0xe0] sm:$0xf]
  %v52 = vld [vmem:[%s0 + $0xe4] sm:$0xff]
  %v53 = vld [vmem:[%s0 + $0xec] sm:$0xf]
  %v54 = vld [vmem:[%s0 + $0xf0] sm:$0xff]
  %v55 = vld [vmem:[%s0 + $0xf8] sm:$0xf]
  %v56 = vld [vmem:[%s0 + $0xfc] sm:$0xff]
  %v57 = vld [vmem:[%s0 + $0x104] sm:$0xf]
  %v58 = vld [vmem:[%s0 + $0x108] sm:$0xff]
  %v59 = vld [vmem:[%s0 + $0x110] sm:$0xf]
  %v60 = vld [vmem:[%s0 + $0x114] sm:$0xff]
  %v61 = vld [vmem:[%s0 + $0x11c] sm:$0xf]
  %v62 = vld [vmem:[%s0 + $0x120] sm:$0xff]
  %v63 = vld [vmem:[%s0 + $0x128] sm:$0xf]
  %v64 = vld [vmem:[%s0 + $0x12c] sm:$0xff]
  %v65 = vld [vmem:[%s0 + $0x134] sm:$0xf]
  %v66 = vld [vmem:[%s0 + $0x138] sm:$0xff]
  %v67 = vld [vmem:[%s0 + $0x140] sm:$0xf]
  %v68 = vld [vmem:[%s0 + $0x144] sm:$0xff]
  %v69 = vld [vmem:[%s0 + $0x14c] sm:$0xf]
  %v70 = vld [vmem:[%s0 + $0x150] sm:$0xff]
  %v71 = vld [vmem:[%s0 + $0x158] sm:$0xf]
  %v72 = vld [vmem:[%s0 + $0x15c] sm:$0xff]
  %v73 = vld [vmem:[%s0 + $0x164] sm:$0xf]
  %v74 = vld [vmem:[%s0 + $0x168] sm:$0xff]
  %v75 = vld [vmem:[%s0 + $0x170] sm:$0xf]
  %v76 = vld [vmem:[%s0 + $0x174] sm:$0xff]
  %v77 = vld [vmem:[%s0 + $0x17c] sm:$0xf]
  %v78 = vld [vmem:[%s0 + $0x180] sm:$0xff]
  %v79 = vld [vmem:[%s0 + $0x188] sm:$0xf]
  %v80 = vld [vmem:[%s0 + $0x18c] sm:$0xff]
  %v81 = vld [vmem:[%s0 + $0x194] sm:$0xf]
  %v82 = vld [vmem:[%s0 + $0x198] sm:$0xff]
  %v83 = vld [vmem:[%s0 + $0x1a0] sm:$0xf]
  %v84 = vld [vmem:[%s0 + $0x1a4] sm:$0xff]
  %v85 = vld [vmem:[%s0 + $0x1ac] sm:$0xf]
  %v86 = vld [vmem:[%s0 + $0x1b0] sm:$0xff]
  %v87 = vld [vmem:[%s0 + $0x1b8] sm:$0xf]
  %v88 = vld [vmem:[%s0 + $0x1bc] sm:$0xff]
  %v89 = vld [vmem:[%s0 + $0x1c4] sm:$0xf]
  %v90 = vld [vmem:[%s0 + $0x1c8] sm:$0xff]
  %v91 = vld [vmem:[%s0 + $0x1d0] sm:$0xf]
  %v92 = vld [vmem:[%s0 + $0x1d4] sm:$0xff]
  %v93 = vld [vmem:[%s0 + $0x1dc] sm:$0xf]
  %v94 = vld [vmem:[%s0 + $0x1e0] sm:$0xff]
  %v95 = vld [vmem:[%s0 + $0x1e8] sm:$0xf]
  %v96 = vld [vmem:[%s0 + $0x1ec] sm:$0xff]
  %v97 = vld [vmem:[%s0 + $0x1f4] sm:$0xf]
  %v98 = vld [vmem:[%s0 + $0x1f8] sm:$0xff]
  %v99 = vld [vmem:[%s0 + $0x200] sm:$0xf]
  %v100 = vld [vmem:[%s0 + $0x204] sm:$0xff]
  %v101 = vld [vmem:[%s0 + $0x20c] sm:$0xf]
  %v102 = vld [vmem:[%s0 + $0x210] sm:$0xff]
  %v103 = vld [vmem:[%s0 + $0x218] sm:$0xf]
  %v104 = vld [vmem:[%s0 + $0x21c] sm:$0xff]
  %v105 = vld [vmem:[%s0 + $0x224] sm:$0xf]
  %v106 = vld [vmem:[%s0 + $0x228] sm:$0xff]
  %v107 = vld [vmem:[%s0 + $0x230] sm:$0xf]
  %v108 = vld [vmem:[%s0 + $0x234] sm:$0xff]
  %v109 = vld [vmem:[%s0 + $0x23c] sm:$0xf]
  %v110 = vld [vmem:[%s0 + $0x240] sm:$0xff]
  %v111 = vld [vmem:[%s0 + $0x248] sm:$0xf]
  %v112 = vld [vmem:[%s0 + $0x24c] sm:$0xff]
  %v113 = vld [vmem:[%s0 + $0x254] sm:$0xf]
  %v114 = vld [vmem:[%s0 + $0x258] sm:$0xff]
  %v115 = vld [vmem:[%s0 + $0x260] sm:$0xf]
  %v116 = vld [vmem:[%s0 + $0x264] sm:$0xff]
  %v117 = vld [vmem:[%s0 + $0x26c] sm:$0xf]
  %v118 = vld [vmem:[%s0 + $0x270] sm:$0xff]
  %v119 = vld [vmem:[%s0 + $0x278] sm:$0xf]
  %v120 = vld [vmem:[%s0 + $0x27c] sm:$0xff]
  %v121 = vld [vmem:[%s0 + $0x284] sm:$0xf]
  %v122 = vld [vmem:[%s0 + $0x288] sm:$0xff]
  %v123 = vld [vmem:[%s0 + $0x290] sm:$0xf]
  %v124 = vld [vmem:[%s0 + $0x294] sm:$0xff]
  %v125 = vld [vmem:[%s0 + $0x29c] sm:$0xf]
  %v126 = vld [vmem:[%s0 + $0x2a0] sm:$0xff]
  %v127 = vld [vmem:[%s0 + $0x2a8] sm:$0xf]
  %v128 = vld [vmem:[%s0 + $0x2ac] sm:$0xff]
  %v129 = vld [vmem:[%s0 + $0x2b4] sm:$0xf]
  %v130 = vld [vmem:[%s0 + $0x2b8] sm:$0xff]
  %v131 = vld [vmem:[%s0 + $0x2c0] sm:$0xf]
  %v132 = vld [vmem:[%s0 + $0x2c4] sm:$0xff]
  %v133 = vld [vmem:[%s0 + $0x2cc] sm:$0xf]
  %v134 = vld [vmem:[%s0 + $0x2d0] sm:$0xff]
  %v135 = vld [vmem:[%s0 + $0x2d8] sm:$0xf]
  %v136 = vld [vmem:[%s0 + $0x2dc] sm:$0xff]
  %v137 = vld [vmem:[%s0 + $0x2e4] sm:$0xf]
  %v138 = vld [vmem:[%s0 + $0x2e8] sm:$0xff]
  %v139 = vld [vmem:[%s0 + $0x2f0] sm:$0xf]
  %v140 = vld [vmem:[%s0 + $0x2f4] sm:$0xff]
  %v141 = vld [vmem:[%s0 + $0x2fc] sm:$0xf]
  %v142 = vld [vmem:[%s1] sm:$0xf]
  %v143 = vld [vmem:[%s1 + $0x4] sm:$0xf]
  %v144 = vld [vmem:[%s1 + $0x8] sm:$0xf]
  %v145 = vld [vmem:[%s1 + $0xc] sm:$0xf]
  %v146 = vld [vmem:[%s1 + $0x10] sm:$0xf]
  %v147 = vld [vmem:[%s1 + $0x14] sm:$0xf]
  %v148 = vld [vmem:[%s1 + $0x18] sm:$0xf]
  %v149 = vld [vmem:[%s1 + $0x1c] sm:$0xf]
  %v150 = vld [vmem:[%s1 + $0x20] sm:$0xf]
  %v151 = vld [vmem:[%s1 + $0x24] sm:$0xf]
  %v152 = vld [vmem:[%s1 + $0x28] sm:$0xf]
  %v153 = vld [vmem:[%s1 + $0x2c] sm:$0xf]
  %v154 = vld [vmem:[%s1 + $0x30] sm:$0xf]
  %v155 = vld [vmem:[%s1 + $0x34] sm:$0xf]
  %v156 = vld [vmem:[%s1 + $0x38] sm:$0xf]
  %v157 = vld [vmem:[%s1 + $0x3c] sm:$0xf]
  %v158 = vld [vmem:[%s1 + $0x40] sm:$0xf]
  %v159 = vld [vmem:[%s1 + $0x44] sm:$0xf]
  %v160 = vld [vmem:[%s1 + $0x48] sm:$0xf]
  %v161 = vld [vmem:[%s1 + $0x4c] sm:$0xf]
  %v162 = vld [vmem:[%s1 + $0x50] sm:$0xf]
  %v163 = vld [vmem:[%s1 + $0x54] sm:$0xf]
  %v164 = vld [vmem:[%s1 + $0x58] sm:$0xf]
  %v165 = vld [vmem:[%s1 + $0x5c] sm:$0xf]
  %v166 = vld [vmem:[%s1 + $0x60] sm:$0xf]
  %v167 = vld [vmem:[%s1 + $0x64] sm:$0xf]
  %v168 = vld [vmem:[%s1 + $0x68] sm:$0xf]
  %v169 = vld [vmem:[%s1 + $0x6c] sm:$0xf]
  %v170 = vld [vmem:[%s1 + $0x70] sm:$0xf]
  %v171 = vld [vmem:[%s1 + $0x74] sm:$0xf]
  %v172 = vld [vmem:[%s1 + $0x78] sm:$0xf]
  %v173 = vld [vmem:[%s1 + $0x7c] sm:$0xf]
  %v174 = vld [vmem:[%s1 + $0x80] sm:$0xf]
  %v175 = vld [vmem:[%s1 + $0x84] sm:$0xf]
  %v176 = vld [vmem:[%s1 + $0x88] sm:$0xf]
  %v177 = vld [vmem:[%s1 + $0x8c] sm:$0xf]
  %v178 = vld [vmem:[%s1 + $0x90] sm:$0xf]
  %v179 = vld [vmem:[%s1 + $0x94] sm:$0xf]
  %v180 = vld [vmem:[%s1 + $0x98] sm:$0xf]
  %v181 = vld [vmem:[%s1 + $0x9c] sm:$0xf]
  %v182 = vld [vmem:[%s1 + $0xa0] sm:$0xf]
  %v183 = vld [vmem:[%s1 + $0xa4] sm:$0xf]
  %v184 = vld [vmem:[%s1 + $0xa8] sm:$0xf]
  %v185 = vld [vmem:[%s1 + $0xac] sm:$0xf]
  %v186 = vld [vmem:[%s1 + $0xb0] sm:$0xf]
  %v187 = vld [vmem:[%s1 + $0xb4] sm:$0xf]
  %v188 = vld [vmem:[%s1 + $0xb8] sm:$0xf]
  %v189 = vld [vmem:[%s1 + $0xbc] sm:$0xf]
  %v190 = vld [vmem:[%s2] sm:$0x1]
  %v192 = vperm.slane %v190, 0
  %v322 = vunpack.c.l.b16 %v14
  %v323 = vunpack.c.h.b16 %v14
  %v324 = vunpack.c.l.b16 %v15
  %v325 = vunpack.c.l.b16 %v16
  %v326 = vunpack.c.h.b16 %v16
  %v327 = vunpack.c.l.b16 %v17
  %v328 = vunpack.c.l.b16 %v18
  %v329 = vunpack.c.h.b16 %v18
  %v330 = vunpack.c.l.b16 %v19
  %v331 = vunpack.c.l.b16 %v20
  %v332 = vunpack.c.h.b16 %v20
  %v333 = vunpack.c.l.b16 %v21
  %v334 = vunpack.c.l.b16 %v22
  %v335 = vunpack.c.h.b16 %v22
  %v336 = vunpack.c.l.b16 %v23
  %v337 = vunpack.c.l.b16 %v24
  %v338 = vunpack.c.h.b16 %v24
  %v339 = vunpack.c.l.b16 %v25
  %v340 = vunpack.c.l.b16 %v26
  %v341 = vunpack.c.h.b16 %v26
  %v342 = vunpack.c.l.b16 %v27
  %v343 = vunpack.c.l.b16 %v28
  %v344 = vunpack.c.h.b16 %v28
  %v345 = vunpack.c.l.b16 %v29
  %v346 = vunpack.c.l.b16 %v30
  %v347 = vunpack.c.h.b16 %v30
  %v348 = vunpack.c.l.b16 %v31
  %v349 = vunpack.c.l.b16 %v32
  %v350 = vunpack.c.h.b16 %v32
  %v351 = vunpack.c.l.b16 %v33
  %v352 = vunpack.c.l.b16 %v34
  %v353 = vunpack.c.h.b16 %v34
  %v354 = vunpack.c.l.b16 %v35
  %v355 = vunpack.c.l.b16 %v36
  %v356 = vunpack.c.h.b16 %v36
  %v357 = vunpack.c.l.b16 %v37
  %v358 = vunpack.c.l.b16 %v38
  %v359 = vunpack.c.h.b16 %v38
  %v360 = vunpack.c.l.b16 %v39
  %v361 = vunpack.c.l.b16 %v40
  %v362 = vunpack.c.h.b16 %v40
  %v363 = vunpack.c.l.b16 %v41
  %v364 = vunpack.c.l.b16 %v42
  %v365 = vunpack.c.h.b16 %v42
  %v366 = vunpack.c.l.b16 %v43
  %v367 = vunpack.c.l.b16 %v44
  %v368 = vunpack.c.h.b16 %v44
  %v369 = vunpack.c.l.b16 %v45
  %v370 = vunpack.c.l.b16 %v46
  %v371 = vunpack.c.h.b16 %v46
  %v372 = vunpack.c.l.b16 %v47
  %v373 = vunpack.c.l.b16 %v48
  %v374 = vunpack.c.h.b16 %v48
  %v375 = vunpack.c.l.b16 %v49
  %v376 = vunpack.c.l.b16 %v50
  %v377 = vunpack.c.h.b16 %v50
  %v378 = vunpack.c.l.b16 %v51
  %v379 = vunpack.c.l.b16 %v52
  %v380 = vunpack.c.h.b16 %v52
  %v381 = vunpack.c.l.b16 %v53
  %v382 = vunpack.c.l.b16 %v54
  %v383 = vunpack.c.h.b16 %v54
  %v384 = vunpack.c.l.b16 %v55
  %v385 = vunpack.c.l.b16 %v56
  %v386 = vunpack.c.h.b16 %v56
  %v387 = vunpack.c.l.b16 %v57
  %v388 = vunpack.c.l.b16 %v58
  %v389 = vunpack.c.h.b16 %v58
  %v390 = vunpack.c.l.b16 %v59
  %v391 = vunpack.c.l.b16 %v60
  %v392 = vunpack.c.h.b16 %v60
  %v393 = vunpack.c.l.b16 %v61
  %v394 = vunpack.c.l.b16 %v62
  %v395 = vunpack.c.h.b16 %v62
  %v396 = vunpack.c.l.b16 %v63
  %v397 = vunpack.c.l.b16 %v64
  %v398 = vunpack.c.h.b16 %v64
  %v399 = vunpack.c.l.b16 %v65
  %v400 = vunpack.c.l.b16 %v66
  %v401 = vunpack.c.h.b16 %v66
  %v402 = vunpack.c.l.b16 %v67
  %v403 = vunpack.c.l.b16 %v68
  %v404 = vunpack.c.h.b16 %v68
  %v405 = vunpack.c.l.b16 %v69
  %v406 = vunpack.c.l.b16 %v70
  %v407 = vunpack.c.h.b16 %v70
  %v408 = vunpack.c.l.b16 %v71
  %v409 = vunpack.c.l.b16 %v72
  %v410 = vunpack.c.h.b16 %v72
  %v411 = vunpack.c.l.b16 %v73
  %v412 = vunpack.c.l.b16 %v74
  %v413 = vunpack.c.h.b16 %v74
  %v414 = vunpack.c.l.b16 %v75
  %v415 = vunpack.c.l.b16 %v76
  %v416 = vunpack.c.h.b16 %v76
  %v417 = vunpack.c.l.b16 %v77
  %v418 = vunpack.c.l.b16 %v78
  %v419 = vunpack.c.h.b16 %v78
  %v420 = vunpack.c.l.b16 %v79
  %v421 = vunpack.c.l.b16 %v80
  %v422 = vunpack.c.h.b16 %v80
  %v423 = vunpack.c.l.b16 %v81
  %v424 = vunpack.c.l.b16 %v82
  %v425 = vunpack.c.h.b16 %v82
  %v426 = vunpack.c.l.b16 %v83
  %v427 = vunpack.c.l.b16 %v84
  %v428 = vunpack.c.h.b16 %v84
  %v429 = vunpack.c.l.b16 %v85
  %v430 = vunpack.c.l.b16 %v86
  %v431 = vunpack.c.h.b16 %v86
  %v432 = vunpack.c.l.b16 %v87
  %v433 = vunpack.c.l.b16 %v88
  %v434 = vunpack.c.h.b16 %v88
  %v435 = vunpack.c.l.b16 %v89
  %v436 = vunpack.c.l.b16 %v90
  %v437 = vunpack.c.h.b16 %v90
  %v438 = vunpack.c.l.b16 %v91
  %v439 = vunpack.c.l.b16 %v92
  %v440 = vunpack.c.h.b16 %v92
  %v441 = vunpack.c.l.b16 %v93
  %v442 = vunpack.c.l.b16 %v94
  %v443 = vunpack.c.h.b16 %v94
  %v444 = vunpack.c.l.b16 %v95
  %v445 = vunpack.c.l.b16 %v96
  %v446 = vunpack.c.h.b16 %v96
  %v447 = vunpack.c.l.b16 %v97
  %v448 = vunpack.c.l.b16 %v98
  %v449 = vunpack.c.h.b16 %v98
  %v450 = vunpack.c.l.b16 %v99
  %v451 = vunpack.c.l.b16 %v100
  %v452 = vunpack.c.h.b16 %v100
  %v453 = vunpack.c.l.b16 %v101
  %v454 = vunpack.c.l.b16 %v102
  %v455 = vunpack.c.h.b16 %v102
  %v456 = vunpack.c.l.b16 %v103
  %v457 = vunpack.c.l.b16 %v104
  %v458 = vunpack.c.h.b16 %v104
  %v459 = vunpack.c.l.b16 %v105
  %v460 = vunpack.c.l.b16 %v106
  %v461 = vunpack.c.h.b16 %v106
  %v462 = vunpack.c.l.b16 %v107
  %v463 = vunpack.c.l.b16 %v108
  %v464 = vunpack.c.h.b16 %v108
  %v465 = vunpack.c.l.b16 %v109
  %v466 = vunpack.c.l.b16 %v110
  %v467 = vunpack.c.h.b16 %v110
  %v468 = vunpack.c.l.b16 %v111
  %v469 = vunpack.c.l.b16 %v112
  %v470 = vunpack.c.h.b16 %v112
  %v471 = vunpack.c.l.b16 %v113
  %v472 = vunpack.c.l.b16 %v114
  %v473 = vunpack.c.h.b16 %v114
  %v474 = vunpack.c.l.b16 %v115
  %v475 = vunpack.c.l.b16 %v116
  %v476 = vunpack.c.h.b16 %v116
  %v477 = vunpack.c.l.b16 %v117
  %v478 = vunpack.c.l.b16 %v118
  %v479 = vunpack.c.h.b16 %v118
  %v480 = vunpack.c.l.b16 %v119
  %v481 = vunpack.c.l.b16 %v120
  %v482 = vunpack.c.h.b16 %v120
  %v483 = vunpack.c.l.b16 %v121
  %v484 = vunpack.c.l.b16 %v122
  %v485 = vunpack.c.h.b16 %v122
  %v486 = vunpack.c.l.b16 %v123
  %v487 = vunpack.c.l.b16 %v124
  %v488 = vunpack.c.h.b16 %v124
  %v489 = vunpack.c.l.b16 %v125
  %v490 = vunpack.c.l.b16 %v126
  %v491 = vunpack.c.h.b16 %v126
  %v492 = vunpack.c.l.b16 %v127
  %v493 = vunpack.c.l.b16 %v128
  %v494 = vunpack.c.h.b16 %v128
  %v495 = vunpack.c.l.b16 %v129
  %v496 = vunpack.c.l.b16 %v130
  %v497 = vunpack.c.h.b16 %v130
  %v498 = vunpack.c.l.b16 %v131
  %v499 = vunpack.c.l.b16 %v132
  %v500 = vunpack.c.h.b16 %v132
  %v501 = vunpack.c.l.b16 %v133
  %v502 = vunpack.c.l.b16 %v134
  %v503 = vunpack.c.h.b16 %v134
  %v504 = vunpack.c.l.b16 %v135
  %v505 = vunpack.c.l.b16 %v136
  %v506 = vunpack.c.h.b16 %v136
  %v507 = vunpack.c.l.b16 %v137
  %v508 = vunpack.c.l.b16 %v138
  %v509 = vunpack.c.h.b16 %v138
  %v510 = vunpack.c.l.b16 %v139
  %v511 = vunpack.c.l.b16 %v140
  %v512 = vunpack.c.h.b16 %v140
  %v513 = vunpack.c.l.b16 %v141
  %v514 = vpack.c.b16 %v325, %v322
  %v515 = vpack.c.b16 %v326, %v323
  %v516 = vpack.c.b16 %v327, %v324
  %v517 = vpack.c.b16 %v331, %v328
  %v518 = vpack.c.b16 %v332, %v329
  %v519 = vpack.c.b16 %v333, %v330
  %v520 = vpack.c.b16 %v337, %v334
  %v521 = vpack.c.b16 %v338, %v335
  %v522 = vpack.c.b16 %v339, %v336
  %v523 = vpack.c.b16 %v343, %v340
  %v524 = vpack.c.b16 %v344, %v341
  %v525 = vpack.c.b16 %v345, %v342
  %v526 = vpack.c.b16 %v349, %v346
  %v527 = vpack.c.b16 %v350, %v347
  %v528 = vpack.c.b16 %v351, %v348
  %v529 = vpack.c.b16 %v355, %v352
  %v530 = vpack.c.b16 %v356, %v353
  %v531 = vpack.c.b16 %v357, %v354
  %v532 = vpack.c.b16 %v361, %v358
  %v533 = vpack.c.b16 %v362, %v359
  %v534 = vpack.c.b16 %v363, %v360
  %v535 = vpack.c.b16 %v367, %v364
  %v536 = vpack.c.b16 %v368, %v365
  %v537 = vpack.c.b16 %v369, %v366
  %v538 = vpack.c.b16 %v373, %v370
  %v539 = vpack.c.b16 %v374, %v371
  %v540 = vpack.c.b16 %v375, %v372
  %v541 = vpack.c.b16 %v379, %v376
  %v542 = vpack.c.b16 %v380, %v377
  %v543 = vpack.c.b16 %v381, %v378
  %v544 = vpack.c.b16 %v385, %v382
  %v545 = vpack.c.b16 %v386, %v383
  %v546 = vpack.c.b16 %v387, %v384
  %v547 = vpack.c.b16 %v391, %v388
  %v548 = vpack.c.b16 %v392, %v389
  %v549 = vpack.c.b16 %v393, %v390
  %v550 = vpack.c.b16 %v397, %v394
  %v551 = vpack.c.b16 %v398, %v395
  %v552 = vpack.c.b16 %v399, %v396
  %v553 = vpack.c.b16 %v403, %v400
  %v554 = vpack.c.b16 %v404, %v401
  %v555 = vpack.c.b16 %v405, %v402
  %v556 = vpack.c.b16 %v409, %v406
  %v557 = vpack.c.b16 %v410, %v407
  %v558 = vpack.c.b16 %v411, %v408
  %v559 = vpack.c.b16 %v415, %v412
  %v560 = vpack.c.b16 %v416, %v413
  %v561 = vpack.c.b16 %v417, %v414
  %v562 = vpack.c.b16 %v421, %v418
  %v563 = vpack.c.b16 %v422, %v419
  %v564 = vpack.c.b16 %v423, %v420
  %v565 = vpack.c.b16 %v427, %v424
  %v566 = vpack.c.b16 %v428, %v425
  %v567 = vpack.c.b16 %v429, %v426
  %v568 = vpack.c.b16 %v433, %v430
  %v569 = vpack.c.b16 %v434, %v431
  %v570 = vpack.c.b16 %v435, %v432
  %v571 = vpack.c.b16 %v439, %v436
  %v572 = vpack.c.b16 %v440, %v437
  %v573 = vpack.c.b16 %v441, %v438
  %v574 = vpack.c.b16 %v445, %v442
  %v575 = vpack.c.b16 %v446, %v443
  %v576 = vpack.c.b16 %v447, %v444
  %v577 = vpack.c.b16 %v451, %v448
  %v578 = vpack.c.b16 %v452, %v449
  %v579 = vpack.c.b16 %v453, %v450
  %v580 = vpack.c.b16 %v457, %v454
  %v581 = vpack.c.b16 %v458, %v455
  %v582 = vpack.c.b16 %v459, %v456
  %v583 = vpack.c.b16 %v463, %v460
  %v584 = vpack.c.b16 %v464, %v461
  %v585 = vpack.c.b16 %v465, %v462
  %v586 = vpack.c.b16 %v469, %v466
  %v587 = vpack.c.b16 %v470, %v467
  %v588 = vpack.c.b16 %v471, %v468
  %v589 = vpack.c.b16 %v475, %v472
  %v590 = vpack.c.b16 %v476, %v473
  %v591 = vpack.c.b16 %v477, %v474
  %v592 = vpack.c.b16 %v481, %v478
  %v593 = vpack.c.b16 %v482, %v479
  %v594 = vpack.c.b16 %v483, %v480
  %v595 = vpack.c.b16 %v487, %v484
  %v596 = vpack.c.b16 %v488, %v485
  %v597 = vpack.c.b16 %v489, %v486
  %v598 = vpack.c.b16 %v493, %v490
  %v599 = vpack.c.b16 %v494, %v491
  %v600 = vpack.c.b16 %v495, %v492
  %v601 = vpack.c.b16 %v499, %v496
  %v602 = vpack.c.b16 %v500, %v497
  %v603 = vpack.c.b16 %v501, %v498
  %v604 = vpack.c.b16 %v505, %v502
  %v605 = vpack.c.b16 %v506, %v503
  %v606 = vpack.c.b16 %v507, %v504
  %v607 = vpack.c.b16 %v511, %v508
  %v608 = vpack.c.b16 %v512, %v509
  %v609 = vpack.c.b16 %v513, %v510
  %v754 = vunpack.c.l.b16 %v142
  %v755 = vunpack.c.l.b16 %v143
  %v756 = vunpack.c.l.b16 %v144
  %v757 = vunpack.c.l.b16 %v145
  %v758 = vunpack.c.l.b16 %v146
  %v759 = vunpack.c.l.b16 %v147
  %v760 = vunpack.c.l.b16 %v148
  %v761 = vunpack.c.l.b16 %v149
  %v762 = vunpack.c.l.b16 %v150
  %v763 = vunpack.c.l.b16 %v151
  %v764 = vunpack.c.l.b16 %v152
  %v765 = vunpack.c.l.b16 %v153
  %v766 = vunpack.c.l.b16 %v154
  %v767 = vunpack.c.l.b16 %v155
  %v768 = vunpack.c.l.b16 %v156
  %v769 = vunpack.c.l.b16 %v157
  %v770 = vunpack.c.l.b16 %v158
  %v771 = vunpack.c.l.b16 %v159
  %v772 = vunpack.c.l.b16 %v160
  %v773 = vunpack.c.l.b16 %v161
  %v774 = vunpack.c.l.b16 %v162
  %v775 = vunpack.c.l.b16 %v163
  %v776 = vunpack.c.l.b16 %v164
  %v777 = vunpack.c.l.b16 %v165
  %v778 = vunpack.c.l.b16 %v166
  %v779 = vunpack.c.l.b16 %v167
  %v780 = vunpack.c.l.b16 %v168
  %v781 = vunpack.c.l.b16 %v169
  %v782 = vunpack.c.l.b16 %v170
  %v783 = vunpack.c.l.b16 %v171
  %v784 = vunpack.c.l.b16 %v172
  %v785 = vunpack.c.l.b16 %v173
  %v786 = vunpack.c.l.b16 %v174
  %v787 = vunpack.c.l.b16 %v175
  %v788 = vunpack.c.l.b16 %v176
  %v789 = vunpack.c.l.b16 %v177
  %v790 = vunpack.c.l.b16 %v178
  %v791 = vunpack.c.l.b16 %v179
  %v792 = vunpack.c.l.b16 %v180
  %v793 = vunpack.c.l.b16 %v181
  %v794 = vunpack.c.l.b16 %v182
  %v795 = vunpack.c.l.b16 %v183
  %v796 = vunpack.c.l.b16 %v184
  %v797 = vunpack.c.l.b16 %v185
  %v798 = vunpack.c.l.b16 %v186
  %v799 = vunpack.c.l.b16 %v187
  %v800 = vunpack.c.l.b16 %v188
  %v801 = vunpack.c.l.b16 %v189
  %v802 = vpack.c.b16 %v755, %v754
  %v803 = vpack.c.b16 %v757, %v756
  %v804 = vpack.c.b16 %v759, %v758
  %v805 = vpack.c.b16 %v761, %v760
  %v806 = vpack.c.b16 %v763, %v762
  %v807 = vpack.c.b16 %v765, %v764
  %v808 = vpack.c.b16 %v767, %v766
  %v809 = vpack.c.b16 %v769, %v768
  %v810 = vpack.c.b16 %v771, %v770
  %v811 = vpack.c.b16 %v773, %v772
  %v812 = vpack.c.b16 %v775, %v774
  %v813 = vpack.c.b16 %v777, %v776
  %v814 = vpack.c.b16 %v779, %v778
  %v815 = vpack.c.b16 %v781, %v780
  %v816 = vpack.c.b16 %v783, %v782
  %v817 = vpack.c.b16 %v785, %v784
  %v818 = vpack.c.b16 %v787, %v786
  %v819 = vpack.c.b16 %v789, %v788
  %v820 = vpack.c.b16 %v791, %v790
  %v821 = vpack.c.b16 %v793, %v792
  %v822 = vpack.c.b16 %v795, %v794
  %v823 = vpack.c.b16 %v797, %v796
  %v824 = vpack.c.b16 %v799, %v798
  %v825 = vpack.c.b16 %v801, %v800
  %850 = vmatpush.bf16.msra.mxu0 %v809
  %851 = vmatpush.bf16.msra.mxu0 %v808
  %852 = vmatpush.bf16.msra.mxu0 %v807
  %853 = vmatpush.bf16.msra.mxu0 %v806
  %854 = vmatpush.bf16.msra.mxu0 %v805
  %855 = vmatpush.bf16.msra.mxu0 %v804
  %856 = vmatpush.bf16.msra.mxu0 %v803
  %857 = vmatpush.bf16.msra.mxu0 %v802
  %858 = vmatmul.bf16.gmra.mxu0 %v514
  %v859 = vpop.f32.mrf.mxu0
  %v860 = vadd.f32 %v192, %v859
  %v861 = vpop.f32.mrf.mxu0
  %v862 = vadd.f32 %v192, %v861
  %863 = vmatmul.bf16.gmra.mxu0 %v517
  %v864 = vpop.f32.mrf.mxu0
  %v865 = vadd.f32 %v192, %v864
  %v866 = vpop.f32.mrf.mxu0
  %v867 = vadd.f32 %v192, %v866
  %868 = vmatmul.bf16.gmra.mxu0 %v520
  %v869 = vpop.f32.mrf.mxu0
  %v870 = vadd.f32 %v192, %v869
  %v871 = vpop.f32.mrf.mxu0
  %v872 = vadd.f32 %v192, %v871
  %873 = vmatmul.bf16.gmra.mxu0 %v523
  %v874 = vpop.f32.mrf.mxu0
  %v875 = vadd.f32 %v192, %v874
  %v876 = vpop.f32.mrf.mxu0
  %v877 = vadd.f32 %v192, %v876
  %878 = vmatmul.bf16.gmra.mxu0 %v526
  %v879 = vpop.f32.mrf.mxu0
  %v880 = vadd.f32 %v192, %v879
  %v881 = vpop.f32.mrf.mxu0
  %v882 = vadd.f32 %v192, %v881
  %883 = vmatmul.bf16.gmra.mxu0 %v529
  %v884 = vpop.f32.mrf.mxu0
  %v885 = vadd.f32 %v192, %v884
  %v886 = vpop.f32.mrf.mxu0
  %v887 = vadd.f32 %v192, %v886
  %888 = vmatmul.bf16.gmra.mxu0 %v532
  %v889 = vpop.f32.mrf.mxu0
  %v890 = vadd.f32 %v192, %v889
  %v891 = vpop.f32.mrf.mxu0
  %v892 = vadd.f32 %v192, %v891
  %893 = vmatmul.bf16.gmra.mxu0 %v535
  %v894 = vpop.f32.mrf.mxu0
  %v895 = vadd.f32 %v192, %v894
  %v896 = vpop.f32.mrf.mxu0
  %v897 = vadd.f32 %v192, %v896
  %898 = vmatmul.bf16.gmra.mxu0 %v538
  %v899 = vpop.f32.mrf.mxu0
  %v900 = vadd.f32 %v192, %v899
  %v901 = vpop.f32.mrf.mxu0
  %v902 = vadd.f32 %v192, %v901
  %903 = vmatmul.bf16.gmra.mxu0 %v541
  %v904 = vpop.f32.mrf.mxu0
  %v905 = vadd.f32 %v192, %v904
  %v906 = vpop.f32.mrf.mxu0
  %v907 = vadd.f32 %v192, %v906
  %908 = vmatmul.bf16.gmra.mxu0 %v544
  %v909 = vpop.f32.mrf.mxu0
  %v910 = vadd.f32 %v192, %v909
  %v911 = vpop.f32.mrf.mxu0
  %v912 = vadd.f32 %v192, %v911
  %913 = vmatmul.bf16.gmra.mxu0 %v547
  %v914 = vpop.f32.mrf.mxu0
  %v915 = vadd.f32 %v192, %v914
  %v916 = vpop.f32.mrf.mxu0
  %v917 = vadd.f32 %v192, %v916
  %918 = vmatmul.bf16.gmra.mxu0 %v550
  %v919 = vpop.f32.mrf.mxu0
  %v920 = vadd.f32 %v192, %v919
  %v921 = vpop.f32.mrf.mxu0
  %v922 = vadd.f32 %v192, %v921
  %923 = vmatmul.bf16.gmra.mxu0 %v553
  %v924 = vpop.f32.mrf.mxu0
  %v925 = vadd.f32 %v192, %v924
  %v926 = vpop.f32.mrf.mxu0
  %v927 = vadd.f32 %v192, %v926
  %928 = vmatmul.bf16.gmra.mxu0 %v556
  %v929 = vpop.f32.mrf.mxu0
  %v930 = vadd.f32 %v192, %v929
  %v931 = vpop.f32.mrf.mxu0
  %v932 = vadd.f32 %v192, %v931
  %933 = vmatmul.bf16.gmra.mxu0 %v559
  %v934 = vpop.f32.mrf.mxu0
  %v935 = vadd.f32 %v192, %v934
  %v936 = vpop.f32.mrf.mxu0
  %v937 = vadd.f32 %v192, %v936
  %938 = vmatmul.bf16.gmra.mxu0 %v562
  %v939 = vpop.f32.mrf.mxu0
  %v940 = vadd.f32 %v192, %v939
  %v941 = vpop.f32.mrf.mxu0
  %v942 = vadd.f32 %v192, %v941
  %943 = vmatmul.bf16.gmra.mxu0 %v565
  %v944 = vpop.f32.mrf.mxu0
  %v945 = vadd.f32 %v192, %v944
  %v946 = vpop.f32.mrf.mxu0
  %v947 = vadd.f32 %v192, %v946
  %948 = vmatmul.bf16.gmra.mxu0 %v568
  %v949 = vpop.f32.mrf.mxu0
  %v950 = vadd.f32 %v192, %v949
  %v951 = vpop.f32.mrf.mxu0
  %v952 = vadd.f32 %v192, %v951
  %953 = vmatmul.bf16.gmra.mxu0 %v571
  %v954 = vpop.f32.mrf.mxu0
  %v955 = vadd.f32 %v192, %v954
  %v956 = vpop.f32.mrf.mxu0
  %v957 = vadd.f32 %v192, %v956
  %958 = vmatmul.bf16.gmra.mxu0 %v574
  %v959 = vpop.f32.mrf.mxu0
  %v960 = vadd.f32 %v192, %v959
  %v961 = vpop.f32.mrf.mxu0
  %v962 = vadd.f32 %v192, %v961
  %963 = vmatmul.bf16.gmra.mxu0 %v577
  %v964 = vpop.f32.mrf.mxu0
  %v965 = vadd.f32 %v192, %v964
  %v966 = vpop.f32.mrf.mxu0
  %v967 = vadd.f32 %v192, %v966
  %968 = vmatmul.bf16.gmra.mxu0 %v580
  %v969 = vpop.f32.mrf.mxu0
  %v970 = vadd.f32 %v192, %v969
  %v971 = vpop.f32.mrf.mxu0
  %v972 = vadd.f32 %v192, %v971
  %973 = vmatmul.bf16.gmra.mxu0 %v583
  %v974 = vpop.f32.mrf.mxu0
  %v975 = vadd.f32 %v192, %v974
  %v976 = vpop.f32.mrf.mxu0
  %v977 = vadd.f32 %v192, %v976
  %978 = vmatmul.bf16.gmra.mxu0 %v586
  %v979 = vpop.f32.mrf.mxu0
  %v980 = vadd.f32 %v192, %v979
  %v981 = vpop.f32.mrf.mxu0
  %v982 = vadd.f32 %v192, %v981
  %983 = vmatmul.bf16.gmra.mxu0 %v589
  %v984 = vpop.f32.mrf.mxu0
  %v985 = vadd.f32 %v192, %v984
  %v986 = vpop.f32.mrf.mxu0
  %v987 = vadd.f32 %v192, %v986
  %988 = vmatmul.bf16.gmra.mxu0 %v592
  %v989 = vpop.f32.mrf.mxu0
  %v990 = vadd.f32 %v192, %v989
  %v991 = vpop.f32.mrf.mxu0
  %v992 = vadd.f32 %v192, %v991
  %993 = vmatmul.bf16.gmra.mxu0 %v595
  %v994 = vpop.f32.mrf.mxu0
  %v995 = vadd.f32 %v192, %v994
  %v996 = vpop.f32.mrf.mxu0
  %v997 = vadd.f32 %v192, %v996
  %998 = vmatmul.bf16.gmra.mxu0 %v598
  %v999 = vpop.f32.mrf.mxu0
  %v1000 = vadd.f32 %v192, %v999
  %v1001 = vpop.f32.mrf.mxu0
  %v1002 = vadd.f32 %v192, %v1001
  %1003 = vmatmul.bf16.gmra.mxu0 %v601
  %v1004 = vpop.f32.mrf.mxu0
  %v1005 = vadd.f32 %v192, %v1004
  %v1006 = vpop.f32.mrf.mxu0
  %v1007 = vadd.f32 %v192, %v1006
  %1008 = vmatmul.bf16.gmra.mxu0 %v604
  %v1009 = vpop.f32.mrf.mxu0
  %v1010 = vadd.f32 %v192, %v1009
  %v1011 = vpop.f32.mrf.mxu0
  %v1012 = vadd.f32 %v192, %v1011
  %1013 = vmatmul.bf16.gmra.mxu0 %v607
  %v1014 = vpop.f32.mrf.mxu0
  %v1015 = vadd.f32 %v192, %v1014
  %v1016 = vpop.f32.mrf.mxu0
  %v1017 = vadd.f32 %v192, %v1016
  %1018 = vdwg.mxu0
  %1019 = vmatpush.bf16.msra.mxu0 %v817
  %1020 = vmatpush.bf16.msra.mxu0 %v816
  %1021 = vmatpush.bf16.msra.mxu0 %v815
  %1022 = vmatpush.bf16.msra.mxu0 %v814
  %1023 = vmatpush.bf16.msra.mxu0 %v813
  %1024 = vmatpush.bf16.msra.mxu0 %v812
  %1025 = vmatpush.bf16.msra.mxu0 %v811
  %1026 = vmatpush.bf16.msra.mxu0 %v810
  %1027 = vmatmul.bf16.gmra.mxu0 %v515
  %v1028 = vpop.f32.mrf.mxu0
  %v1029 = vadd.f32 %v860, %v1028
  %v1030 = vpop.f32.mrf.mxu0
  %v1031 = vadd.f32 %v862, %v1030
  %1032 = vmatmul.bf16.gmra.mxu0 %v518
  %v1033 = vpop.f32.mrf.mxu0
  %v1034 = vadd.f32 %v865, %v1033
  %v1035 = vpop.f32.mrf.mxu0
  %v1036 = vadd.f32 %v867, %v1035
  %1037 = vmatmul.bf16.gmra.mxu0 %v521
  %v1038 = vpop.f32.mrf.mxu0
  %v1039 = vadd.f32 %v870, %v1038
  %v1040 = vpop.f32.mrf.mxu0
  %v1041 = vadd.f32 %v872, %v1040
  %1042 = vmatmul.bf16.gmra.mxu0 %v524
  %v1043 = vpop.f32.mrf.mxu0
  %v1044 = vadd.f32 %v875, %v1043
  %v1045 = vpop.f32.mrf.mxu0
  %v1046 = vadd.f32 %v877, %v1045
  %1047 = vmatmul.bf16.gmra.mxu0 %v527
  %v1048 = vpop.f32.mrf.mxu0
  %v1049 = vadd.f32 %v880, %v1048
  %v1050 = vpop.f32.mrf.mxu0
  %v1051 = vadd.f32 %v882, %v1050
  %1052 = vmatmul.bf16.gmra.mxu0 %v530
  %v1053 = vpop.f32.mrf.mxu0
  %v1054 = vadd.f32 %v885, %v1053
  %v1055 = vpop.f32.mrf.mxu0
  %v1056 = vadd.f32 %v887, %v1055
  %1057 = vmatmul.bf16.gmra.mxu0 %v533
  %v1058 = vpop.f32.mrf.mxu0
  %v1059 = vadd.f32 %v890, %v1058
  %v1060 = vpop.f32.mrf.mxu0
  %v1061 = vadd.f32 %v892, %v1060
  %1062 = vmatmul.bf16.gmra.mxu0 %v536
  %v1063 = vpop.f32.mrf.mxu0
  %v1064 = vadd.f32 %v895, %v1063
  %v1065 = vpop.f32.mrf.mxu0
  %v1066 = vadd.f32 %v897, %v1065
  %1067 = vmatmul.bf16.gmra.mxu0 %v539
  %v1068 = vpop.f32.mrf.mxu0
  %v1069 = vadd.f32 %v900, %v1068
  %v1070 = vpop.f32.mrf.mxu0
  %v1071 = vadd.f32 %v902, %v1070
  %1072 = vmatmul.bf16.gmra.mxu0 %v542
  %v1073 = vpop.f32.mrf.mxu0
  %v1074 = vadd.f32 %v905, %v1073
  %v1075 = vpop.f32.mrf.mxu0
  %v1076 = vadd.f32 %v907, %v1075
  %1077 = vmatmul.bf16.gmra.mxu0 %v545
  %v1078 = vpop.f32.mrf.mxu0
  %v1079 = vadd.f32 %v910, %v1078
  %v1080 = vpop.f32.mrf.mxu0
  %v1081 = vadd.f32 %v912, %v1080
  %1082 = vmatmul.bf16.gmra.mxu0 %v548
  %v1083 = vpop.f32.mrf.mxu0
  %v1084 = vadd.f32 %v915, %v1083
  %v1085 = vpop.f32.mrf.mxu0
  %v1086 = vadd.f32 %v917, %v1085
  %1087 = vmatmul.bf16.gmra.mxu0 %v551
  %v1088 = vpop.f32.mrf.mxu0
  %v1089 = vadd.f32 %v920, %v1088
  %v1090 = vpop.f32.mrf.mxu0
  %v1091 = vadd.f32 %v922, %v1090
  %1092 = vmatmul.bf16.gmra.mxu0 %v554
  %v1093 = vpop.f32.mrf.mxu0
  %v1094 = vadd.f32 %v925, %v1093
  %v1095 = vpop.f32.mrf.mxu0
  %v1096 = vadd.f32 %v927, %v1095
  %1097 = vmatmul.bf16.gmra.mxu0 %v557
  %v1098 = vpop.f32.mrf.mxu0
  %v1099 = vadd.f32 %v930, %v1098
  %v1100 = vpop.f32.mrf.mxu0
  %v1101 = vadd.f32 %v932, %v1100
  %1102 = vmatmul.bf16.gmra.mxu0 %v560
  %v1103 = vpop.f32.mrf.mxu0
  %v1104 = vadd.f32 %v935, %v1103
  %v1105 = vpop.f32.mrf.mxu0
  %v1106 = vadd.f32 %v937, %v1105
  %1107 = vmatmul.bf16.gmra.mxu0 %v563
  %v1108 = vpop.f32.mrf.mxu0
  %v1109 = vadd.f32 %v940, %v1108
  %v1110 = vpop.f32.mrf.mxu0
  %v1111 = vadd.f32 %v942, %v1110
  %1112 = vmatmul.bf16.gmra.mxu0 %v566
  %v1113 = vpop.f32.mrf.mxu0
  %v1114 = vadd.f32 %v945, %v1113
  %v1115 = vpop.f32.mrf.mxu0
  %v1116 = vadd.f32 %v947, %v1115
  %1117 = vmatmul.bf16.gmra.mxu0 %v569
  %v1118 = vpop.f32.mrf.mxu0
  %v1119 = vadd.f32 %v950, %v1118
  %v1120 = vpop.f32.mrf.mxu0
  %v1121 = vadd.f32 %v952, %v1120
  %1122 = vmatmul.bf16.gmra.mxu0 %v572
  %v1123 = vpop.f32.mrf.mxu0
  %v1124 = vadd.f32 %v955, %v1123
  %v1125 = vpop.f32.mrf.mxu0
  %v1126 = vadd.f32 %v957, %v1125
  %1127 = vmatmul.bf16.gmra.mxu0 %v575
  %v1128 = vpop.f32.mrf.mxu0
  %v1129 = vadd.f32 %v960, %v1128
  %v1130 = vpop.f32.mrf.mxu0
  %v1131 = vadd.f32 %v962, %v1130
  %1132 = vmatmul.bf16.gmra.mxu0 %v578
  %v1133 = vpop.f32.mrf.mxu0
  %v1134 = vadd.f32 %v965, %v1133
  %v1135 = vpop.f32.mrf.mxu0
  %v1136 = vadd.f32 %v967, %v1135
  %1137 = vmatmul.bf16.gmra.mxu0 %v581
  %v1138 = vpop.f32.mrf.mxu0
  %v1139 = vadd.f32 %v970, %v1138
  %v1140 = vpop.f32.mrf.mxu0
  %v1141 = vadd.f32 %v972, %v1140
  %1142 = vmatmul.bf16.gmra.mxu0 %v584
  %v1143 = vpop.f32.mrf.mxu0
  %v1144 = vadd.f32 %v975, %v1143
  %v1145 = vpop.f32.mrf.mxu0
  %v1146 = vadd.f32 %v977, %v1145
  %1147 = vmatmul.bf16.gmra.mxu0 %v587
  %v1148 = vpop.f32.mrf.mxu0
  %v1149 = vadd.f32 %v980, %v1148
  %v1150 = vpop.f32.mrf.mxu0
  %v1151 = vadd.f32 %v982, %v1150
  %1152 = vmatmul.bf16.gmra.mxu0 %v590
  %v1153 = vpop.f32.mrf.mxu0
  %v1154 = vadd.f32 %v985, %v1153
  %v1155 = vpop.f32.mrf.mxu0
  %v1156 = vadd.f32 %v987, %v1155
  %1157 = vmatmul.bf16.gmra.mxu0 %v593
  %v1158 = vpop.f32.mrf.mxu0
  %v1159 = vadd.f32 %v990, %v1158
  %v1160 = vpop.f32.mrf.mxu0
  %v1161 = vadd.f32 %v992, %v1160
  %1162 = vmatmul.bf16.gmra.mxu0 %v596
  %v1163 = vpop.f32.mrf.mxu0
  %v1164 = vadd.f32 %v995, %v1163
  %v1165 = vpop.f32.mrf.mxu0
  %v1166 = vadd.f32 %v997, %v1165
  %1167 = vmatmul.bf16.gmra.mxu0 %v599
  %v1168 = vpop.f32.mrf.mxu0
  %v1169 = vadd.f32 %v1000, %v1168
  %v1170 = vpop.f32.mrf.mxu0
  %v1171 = vadd.f32 %v1002, %v1170
  %1172 = vmatmul.bf16.gmra.mxu0 %v602
  %v1173 = vpop.f32.mrf.mxu0
  %v1174 = vadd.f32 %v1005, %v1173
  %v1175 = vpop.f32.mrf.mxu0
  %v1176 = vadd.f32 %v1007, %v1175
  %1177 = vmatmul.bf16.gmra.mxu0 %v605
  %v1178 = vpop.f32.mrf.mxu0
  %v1179 = vadd.f32 %v1010, %v1178
  %v1180 = vpop.f32.mrf.mxu0
  %v1181 = vadd.f32 %v1012, %v1180
  %1182 = vmatmul.bf16.gmra.mxu0 %v608
  %v1183 = vpop.f32.mrf.mxu0
  %v1184 = vadd.f32 %v1015, %v1183
  %v1185 = vpop.f32.mrf.mxu0
  %v1186 = vadd.f32 %v1017, %v1185
  %1187 = vdwg.mxu0
  %1188 = vmatpush.bf16.msra.mxu0 %v825
  %1189 = vmatpush.bf16.msra.mxu0 %v824
  %1190 = vmatpush.bf16.msra.mxu0 %v823
  %1191 = vmatpush.bf16.msra.mxu0 %v822
  %1192 = vmatpush.bf16.msra.mxu0 %v821
  %1193 = vmatpush.bf16.msra.mxu0 %v820
  %1194 = vmatpush.bf16.msra.mxu0 %v819
  %1195 = vmatpush.bf16.msra.mxu0 %v818
  %1196 = vmatmul.bf16.gmra.mxu0 %v516
  %v1197 = vpop.f32.mrf.mxu0
  %v1198 = vadd.f32 %v1029, %v1197
  %v1199 = vpop.f32.mrf.mxu0
  %v1200 = vadd.f32 %v1031, %v1199
  %1201 = vmatmul.bf16.gmra.mxu0 %v519
  %v1202 = vpop.f32.mrf.mxu0
  %v1203 = vadd.f32 %v1034, %v1202
  %v1204 = vpop.f32.mrf.mxu0
  %v1205 = vadd.f32 %v1036, %v1204
  %1206 = vmatmul.bf16.gmra.mxu0 %v522
  %v1207 = vpop.f32.mrf.mxu0
  %v1208 = vadd.f32 %v1039, %v1207
  %v1209 = vpop.f32.mrf.mxu0
  %v1210 = vadd.f32 %v1041, %v1209
  %1211 = vmatmul.bf16.gmra.mxu0 %v525
  %v1212 = vpop.f32.mrf.mxu0
  %v1213 = vadd.f32 %v1044, %v1212
  %v1214 = vpop.f32.mrf.mxu0
  %v1215 = vadd.f32 %v1046, %v1214
  %1216 = vmatmul.bf16.gmra.mxu0 %v528
  %v1217 = vpop.f32.mrf.mxu0
  %v1218 = vadd.f32 %v1049, %v1217
  %v1219 = vpop.f32.mrf.mxu0
  %v1220 = vadd.f32 %v1051, %v1219
  %1221 = vmatmul.bf16.gmra.mxu0 %v531
  %v1222 = vpop.f32.mrf.mxu0
  %v1223 = vadd.f32 %v1054, %v1222
  %v1224 = vpop.f32.mrf.mxu0
  %v1225 = vadd.f32 %v1056, %v1224
  %1226 = vmatmul.bf16.gmra.mxu0 %v534
  %v1227 = vpop.f32.mrf.mxu0
  %v1228 = vadd.f32 %v1059, %v1227
  %v1229 = vpop.f32.mrf.mxu0
  %v1230 = vadd.f32 %v1061, %v1229
  %1231 = vmatmul.bf16.gmra.mxu0 %v537
  %v1232 = vpop.f32.mrf.mxu0
  %v1233 = vadd.f32 %v1064, %v1232
  %v1234 = vpop.f32.mrf.mxu0
  %v1235 = vadd.f32 %v1066, %v1234
  %1236 = vmatmul.bf16.gmra.mxu0 %v540
  %v1237 = vpop.f32.mrf.mxu0
  %v1238 = vadd.f32 %v1069, %v1237
  %v1239 = vpop.f32.mrf.mxu0
  %v1240 = vadd.f32 %v1071, %v1239
  %1241 = vmatmul.bf16.gmra.mxu0 %v543
  %v1242 = vpop.f32.mrf.mxu0
  %v1243 = vadd.f32 %v1074, %v1242
  %v1244 = vpop.f32.mrf.mxu0
  %v1245 = vadd.f32 %v1076, %v1244
  %1246 = vmatmul.bf16.gmra.mxu0 %v546
  %v1247 = vpop.f32.mrf.mxu0
  %v1248 = vadd.f32 %v1079, %v1247
  %v1249 = vpop.f32.mrf.mxu0
  %v1250 = vadd.f32 %v1081, %v1249
  %1251 = vmatmul.bf16.gmra.mxu0 %v549
  %v1252 = vpop.f32.mrf.mxu0
  %v1253 = vadd.f32 %v1084, %v1252
  %v1254 = vpop.f32.mrf.mxu0
  %v1255 = vadd.f32 %v1086, %v1254
  %1256 = vmatmul.bf16.gmra.mxu0 %v552
  %v1257 = vpop.f32.mrf.mxu0
  %v1258 = vadd.f32 %v1089, %v1257
  %v1259 = vpop.f32.mrf.mxu0
  %v1260 = vadd.f32 %v1091, %v1259
  %1261 = vmatmul.bf16.gmra.mxu0 %v555
  %v1262 = vpop.f32.mrf.mxu0
  %v1263 = vadd.f32 %v1094, %v1262
  %v1264 = vpop.f32.mrf.mxu0
  %v1265 = vadd.f32 %v1096, %v1264
  %1266 = vmatmul.bf16.gmra.mxu0 %v558
  %v1267 = vpop.f32.mrf.mxu0
  %v1268 = vadd.f32 %v1099, %v1267
  %v1269 = vpop.f32.mrf.mxu0
  %v1270 = vadd.f32 %v1101, %v1269
  %1271 = vmatmul.bf16.gmra.mxu0 %v561
  %v1272 = vpop.f32.mrf.mxu0
  %v1273 = vadd.f32 %v1104, %v1272
  %v1274 = vpop.f32.mrf.mxu0
  %v1275 = vadd.f32 %v1106, %v1274
  %1276 = vmatmul.bf16.gmra.mxu0 %v564
  %v1277 = vpop.f32.mrf.mxu0
  %v1278 = vadd.f32 %v1109, %v1277
  %v1279 = vpop.f32.mrf.mxu0
  %v1280 = vadd.f32 %v1111, %v1279
  %1281 = vmatmul.bf16.gmra.mxu0 %v567
  %v1282 = vpop.f32.mrf.mxu0
  %v1283 = vadd.f32 %v1114, %v1282
  %v1284 = vpop.f32.mrf.mxu0
  %v1285 = vadd.f32 %v1116, %v1284
  %1286 = vmatmul.bf16.gmra.mxu0 %v570
  %v1287 = vpop.f32.mrf.mxu0
  %v1288 = vadd.f32 %v1119, %v1287
  %v1289 = vpop.f32.mrf.mxu0
  %v1290 = vadd.f32 %v1121, %v1289
  %1291 = vmatmul.bf16.gmra.mxu0 %v573
  %v1292 = vpop.f32.mrf.mxu0
  %v1293 = vadd.f32 %v1124, %v1292
  %v1294 = vpop.f32.mrf.mxu0
  %v1295 = vadd.f32 %v1126, %v1294
  %1296 = vmatmul.bf16.gmra.mxu0 %v576
  %v1297 = vpop.f32.mrf.mxu0
  %v1298 = vadd.f32 %v1129, %v1297
  %v1299 = vpop.f32.mrf.mxu0
  %v1300 = vadd.f32 %v1131, %v1299
  %1301 = vmatmul.bf16.gmra.mxu0 %v579
  %v1302 = vpop.f32.mrf.mxu0
  %v1303 = vadd.f32 %v1134, %v1302
  %v1304 = vpop.f32.mrf.mxu0
  %v1305 = vadd.f32 %v1136, %v1304
  %1306 = vmatmul.bf16.gmra.mxu0 %v582
  %v1307 = vpop.f32.mrf.mxu0
  %v1308 = vadd.f32 %v1139, %v1307
  %v1309 = vpop.f32.mrf.mxu0
  %v1310 = vadd.f32 %v1141, %v1309
  %1311 = vmatmul.bf16.gmra.mxu0 %v585
  %v1312 = vpop.f32.mrf.mxu0
  %v1313 = vadd.f32 %v1144, %v1312
  %v1314 = vpop.f32.mrf.mxu0
  %v1315 = vadd.f32 %v1146, %v1314
  %1316 = vmatmul.bf16.gmra.mxu0 %v588
  %v1317 = vpop.f32.mrf.mxu0
  %v1318 = vadd.f32 %v1149, %v1317
  %v1319 = vpop.f32.mrf.mxu0
  %v1320 = vadd.f32 %v1151, %v1319
  %1321 = vmatmul.bf16.gmra.mxu0 %v591
  %v1322 = vpop.f32.mrf.mxu0
  %v1323 = vadd.f32 %v1154, %v1322
  %v1324 = vpop.f32.mrf.mxu0
  %v1325 = vadd.f32 %v1156, %v1324
  %1326 = vmatmul.bf16.gmra.mxu0 %v594
  %v1327 = vpop.f32.mrf.mxu0
  %v1328 = vadd.f32 %v1159, %v1327
  %v1329 = vpop.f32.mrf.mxu0
  %v1330 = vadd.f32 %v1161, %v1329
  %1331 = vmatmul.bf16.gmra.mxu0 %v597
  %v1332 = vpop.f32.mrf.mxu0
  %v1333 = vadd.f32 %v1164, %v1332
  %v1334 = vpop.f32.mrf.mxu0
  %v1335 = vadd.f32 %v1166, %v1334
  %1336 = vmatmul.bf16.gmra.mxu0 %v600
  %v1337 = vpop.f32.mrf.mxu0
  %v1338 = vadd.f32 %v1169, %v1337
  %v1339 = vpop.f32.mrf.mxu0
  %v1340 = vadd.f32 %v1171, %v1339
  %1341 = vmatmul.bf16.gmra.mxu0 %v603
  %v1342 = vpop.f32.mrf.mxu0
  %v1343 = vadd.f32 %v1174, %v1342
  %v1344 = vpop.f32.mrf.mxu0
  %v1345 = vadd.f32 %v1176, %v1344
  %1346 = vmatmul.bf16.gmra.mxu0 %v606
  %v1347 = vpop.f32.mrf.mxu0
  %v1348 = vadd.f32 %v1179, %v1347
  %v1349 = vpop.f32.mrf.mxu0
  %v1350 = vadd.f32 %v1181, %v1349
  %1351 = vmatmul.bf16.gmra.mxu0 %v609
  %v1352 = vpop.f32.mrf.mxu0
  %v1353 = vadd.f32 %v1184, %v1352
  %v1354 = vpop.f32.mrf.mxu0
  %v1355 = vadd.f32 %v1186, %v1354
  %1356 = vdwg.mxu0
  %1357 = vst [vmem:[%s3] sm:$0xff] %v1198
  %1358 = vst [vmem:[%s3 + $0x8] sm:$0xff] %v1200
  %1359 = vst [vmem:[%s3 + $0x10] sm:$0xff] %v1203
  %1360 = vst [vmem:[%s3 + $0x18] sm:$0xff] %v1205
  %1361 = vst [vmem:[%s3 + $0x20] sm:$0xff] %v1208
  %1362 = vst [vmem:[%s3 + $0x28] sm:$0xff] %v1210
  %1363 = vst [vmem:[%s3 + $0x30] sm:$0xff] %v1213
  %1364 = vst [vmem:[%s3 + $0x38] sm:$0xff] %v1215
  %1365 = vst [vmem:[%s3 + $0x40] sm:$0xff] %v1218
  %1366 = vst [vmem:[%s3 + $0x48] sm:$0xff] %v1220
  %1367 = vst [vmem:[%s3 + $0x50] sm:$0xff] %v1223
  %1368 = vst [vmem:[%s3 + $0x58] sm:$0xff] %v1225
  %1369 = vst [vmem:[%s3 + $0x60] sm:$0xff] %v1228
  %1370 = vst [vmem:[%s3 + $0x68] sm:$0xff] %v1230
  %1371 = vst [vmem:[%s3 + $0x70] sm:$0xff] %v1233
  %1372 = vst [vmem:[%s3 + $0x78] sm:$0xff] %v1235
  %1373 = vst [vmem:[%s3 + $0x80] sm:$0xff] %v1238
  %1374 = vst [vmem:[%s3 + $0x88] sm:$0xff] %v1240
  %1375 = vst [vmem:[%s3 + $0x90] sm:$0xff] %v1243
  %1376 = vst [vmem:[%s3 + $0x98] sm:$0xff] %v1245
  %1377 = vst [vmem:[%s3 + $0xa0] sm:$0xff] %v1248
  %1378 = vst [vmem:[%s3 + $0xa8] sm:$0xff] %v1250
  %1379 = vst [vmem:[%s3 + $0xb0] sm:$0xff] %v1253
  %1380 = vst [vmem:[%s3 + $0xb8] sm:$0xff] %v1255
  %1381 = vst [vmem:[%s3 + $0xc0] sm:$0xff] %v1258
  %1382 = vst [vmem:[%s3 + $0xc8] sm:$0xff] %v1260
  %1383 = vst [vmem:[%s3 + $0xd0] sm:$0xff] %v1263
  %1384 = vst [vmem:[%s3 + $0xd8] sm:$0xff] %v1265
  %1385 = vst [vmem:[%s3 + $0xe0] sm:$0xff] %v1268
  %1386 = vst [vmem:[%s3 + $0xe8] sm:$0xff] %v1270
  %1387 = vst [vmem:[%s3 + $0xf0] sm:$0xff] %v1273
  %1388 = vst [vmem:[%s3 + $0xf8] sm:$0xff] %v1275
  %1389 = vst [vmem:[%s3 + $0x100] sm:$0xff] %v1278
  %1390 = vst [vmem:[%s3 + $0x108] sm:$0xff] %v1280
  %1391 = vst [vmem:[%s3 + $0x110] sm:$0xff] %v1283
  %1392 = vst [vmem:[%s3 + $0x118] sm:$0xff] %v1285
  %1393 = vst [vmem:[%s3 + $0x120] sm:$0xff] %v1288
  %1394 = vst [vmem:[%s3 + $0x128] sm:$0xff] %v1290
  %1395 = vst [vmem:[%s3 + $0x130] sm:$0xff] %v1293
  %1396 = vst [vmem:[%s3 + $0x138] sm:$0xff] %v1295
  %1397 = vst [vmem:[%s3 + $0x140] sm:$0xff] %v1298
  %1398 = vst [vmem:[%s3 + $0x148] sm:$0xff] %v1300
  %1399 = vst [vmem:[%s3 + $0x150] sm:$0xff] %v1303
  %1400 = vst [vmem:[%s3 + $0x158] sm:$0xff] %v1305
  %1401 = vst [vmem:[%s3 + $0x160] sm:$0xff] %v1308
  %1402 = vst [vmem:[%s3 + $0x168] sm:$0xff] %v1310
  %1403 = vst [vmem:[%s3 + $0x170] sm:$0xff] %v1313
  %1404 = vst [vmem:[%s3 + $0x178] sm:$0xff] %v1315
  %1405 = vst [vmem:[%s3 + $0x180] sm:$0xff] %v1318
  %1406 = vst [vmem:[%s3 + $0x188] sm:$0xff] %v1320
  %1407 = vst [vmem:[%s3 + $0x190] sm:$0xff] %v1323
  %1408 = vst [vmem:[%s3 + $0x198] sm:$0xff] %v1325
  %1409 = vst [vmem:[%s3 + $0x1a0] sm:$0xff] %v1328
  %1410 = vst [vmem:[%s3 + $0x1a8] sm:$0xff] %v1330
  %1411 = vst [vmem:[%s3 + $0x1b0] sm:$0xff] %v1333
  %1412 = vst [vmem:[%s3 + $0x1b8] sm:$0xff] %v1335
  %1413 = vst [vmem:[%s3 + $0x1c0] sm:$0xff] %v1338
  %1414 = vst [vmem:[%s3 + $0x1c8] sm:$0xff] %v1340
  %1415 = vst [vmem:[%s3 + $0x1d0] sm:$0xff] %v1343
  %1416 = vst [vmem:[%s3 + $0x1d8] sm:$0xff] %v1345
  %1417 = vst [vmem:[%s3 + $0x1e0] sm:$0xff] %v1348
  %1418 = vst [vmem:[%s3 + $0x1e8] sm:$0xff] %v1350
  %1419 = vst [vmem:[%s3 + $0x1f0] sm:$0xff] %v1353
  %1420 = vst [vmem:[%s3 + $0x1f8] sm:$0xff] %v1355
  // Predicated region
  $region14: #{resnet_block_forward.4} parent=0 // pred_check
    _
  $region15: #{resnet_block_forward.4} parent=0 // pred_check_branch
    %1422 = sbr.rel (0) target = $region17
  $region16: #{resnet_block_forward.4} parent=0 // pred_region
    _
  $region17: #{resnet_block_forward.4} parent=0 // pred_fallthru
    _
  // Predicated region
  $region18: #{resnet_block_forward.4} parent=0 // pred_check
    _
  $region19: #{resnet_block_forward.4} parent=0 // pred_check_branch
    %1424 = sbr.rel (0) target = $region21
  $region20: #{resnet_block_forward.4} parent=0 // pred_region
    _
  $region21: #{resnet_block_forward.4} parent=0 // pred_fallthru
    _

// kernel: resnet_block_forward.7
$region0: #{resnet_block_forward.7}
  #allocation0 [shape = 'u32[]', space=smem, size = 0x4, offset = 0x4, fixed_abs, tag = 'smem constant byte address 0x4 - core index']
  #allocation1 [shape = 'u32[72,128]{1,0:T(1,128)}', space=vmem, size = 0x9000, scoped, tag = 'internal scratch']
  %s0 = inlined_call_operand.vmem [shape: f32[2,256,128], index: 0, kind: input, shape index: {}]
  %s1 = inlined_call_operand.vmem [shape: f32[2,256,128], index: 1, kind: input, shape index: {}]
  %s2 = inlined_call_operand.vmem [shape: f32[2,256,128], index: 2, kind: output, shape index: {}]
  %s3 = sld [smem:[#allocation0]]
  $region41: #{resnet_block_forward.7} parent=0
    _
  %s5 = ssub.s32 1, %s3
  %s6 = scalar_select 0, %s5, %s3
  loop: start=0, step=1, limit=4
  $region2: #{resnet_block_forward.7} parent=0 // loop_pre_header
    _
  $region3: #{resnet_block_forward.7} parent=0 // loop_header
    %s8 = sphi 0, %s12
    %p9 = scmp.ge.s32.totalorder %s8, 4
    %s18 = sphi 0, %s20
    %s21 = sphi 0, %s18
    %s22 = sphi 0, %s21
    %s38 = sphi 0, %s22
    %s44 = sphi 0, %s46
    %s47 = sphi 0, %s44
    %s48 = sphi 0, %s47
    %s64 = sphi 0, %s48
    %s70 = sphi 0, %s72
    %s73 = sphi 0, %s70
    %s74 = sphi 0, %s73
    %s90 = sphi 0, %s74
  $region4: #{resnet_block_forward.7} parent=0 // loop_header_branch
    %11 = sbr.rel (%p9) target = $region8
  $region5: #{resnet_block_forward.7} parent=0 // loop_body
    %s13 = ssub.s32 %s8, 1
    %s14 = ssub.s32 %s8, 2
    %s15 = sadd.s32 %s8, 1
    %s16 = ssub.s32 %s8, %s15
    %p17 = scmp.eq.s32.totalorder %s16, 0
    %s19 = sadd.s32 %s18, 1
    %s20 = scalar_select %p17, %s18, %s19
    %p23 = pneg %p17
    %p24 = scmp.eq.s32.totalorder %s8, 1
    %p25 = por %p23, %p24
    %p26 = scmp.ne.s32.totalorder %s18, %s21
    %p27 = scmp.eq.s32.totalorder %s8, 0
    %p28 = por %p26, %p27
    %p29 = scmp.ne.s32.totalorder %s18, %s21
    %p30 = scmp.eq.s32.totalorder %s13, 1
    %p31 = por %p29, %p30
    %p32 = scmp.ne.s32.totalorder %s21, %s22
    %p33 = scmp.eq.s32.totalorder %s13, 0
    %p34 = por %p32, %p33
    %p35 = scmp.ne.s32.totalorder %s21, %s22
    %p36 = scmp.eq.s32.totalorder %s14, 1
    %p37 = por %p35, %p36
    %p39 = scmp.ne.s32.totalorder %s22, %s38
    %p40 = scmp.eq.s32.totalorder %s14, 0
    %p41 = por %p39, %p40
    %s42 = ssub.s32 %s8, %s15
    %p43 = scmp.eq.s32.totalorder %s42, 0
    %s45 = sadd.s32 %s44, 1
    %s46 = scalar_select %p43, %s44, %s45
    %p49 = pneg %p43
    %p50 = scmp.eq.s32.totalorder %s8, 1
    %p51 = por %p49, %p50
    %p52 = scmp.ne.s32.totalorder %s44, %s47
    %p53 = scmp.eq.s32.totalorder %s8, 0
    %p54 = por %p52, %p53
    %p55 = scmp.ne.s32.totalorder %s44, %s47
    %p56 = scmp.eq.s32.totalorder %s13, 1
    %p57 = por %p55, %p56
    %p58 = scmp.ne.s32.totalorder %s47, %s48
    %p59 = scmp.eq.s32.totalorder %s13, 0
    %p60 = por %p58, %p59
    %p61 = scmp.ne.s32.totalorder %s47, %s48
    %p62 = scmp.eq.s32.totalorder %s14, 1
    %p63 = por %p61, %p62
    %p65 = scmp.ne.s32.totalorder %s48, %s64
    %p66 = scmp.eq.s32.totalorder %s14, 0
    %p67 = por %p65, %p66
    %s68 = ssub.s32 %s8, %s15
    %p69 = scmp.eq.s32.totalorder %s68, 0
    %s71 = sadd.s32 %s70, 1
    %s72 = scalar_select %p69, %s70, %s71
    %p75 = pneg %p69
    %p76 = scmp.eq.s32.totalorder %s8, 1
    %p77 = por %p75, %p76
    %p78 = scmp.ne.s32.totalorder %s70, %s73
    %p79 = scmp.eq.s32.totalorder %s8, 0
    %p80 = por %p78, %p79
    %p81 = scmp.ne.s32.totalorder %s70, %s73
    %p82 = scmp.eq.s32.totalorder %s13, 1
    %p83 = por %p81, %p82
    %p84 = scmp.ne.s32.totalorder %s73, %s74
    %p85 = scmp.eq.s32.totalorder %s13, 0
    %p86 = por %p84, %p85
    %p87 = scmp.ne.s32.totalorder %s73, %s74
    %p88 = scmp.eq.s32.totalorder %s14, 1
    %p89 = por %p87, %p88
    %p91 = scmp.ne.s32.totalorder %s74, %s90
    %p92 = scmp.eq.s32.totalorder %s14, 0
    %p93 = por %p91, %p92
    %p94 = scmp.le.s32.totalorder 1, %s8
    %p95 = scmp.lt.s32.totalorder %s8, 3
    %p96 = pnand %p94, %p95
    %p97 = pneg %p96
    // Predicated region
    $region9: #{resnet_block_forward.7} parent=5 // pred_check
      _
    $region10: #{resnet_block_forward.7} parent=5 // pred_check_branch
      %99 = sbr.rel (%p96) target = $region12
    $region11: #{resnet_block_forward.7} parent=5 // pred_region
      %s100 = ssub.s32 %s8, 1
    $region12: #{resnet_block_forward.7} parent=5 // pred_fallthru
      _
    %p101 = scmp.lt.s32.totalorder %s8, 2
    // Predicated region
    $region13: #{resnet_block_forward.7} parent=5 // pred_check
      %p102 = pneg %p101
    $region14: #{resnet_block_forward.7} parent=5 // pred_check_branch
      %104 = sbr.rel (%p102) target = $region16
    $region15: #{resnet_block_forward.7} parent=5 // pred_region
      // Predicated region
      $region17: #{resnet_block_forward.7} parent=15 // pred_check
        %p105 = pneg %p28
      $region18: #{resnet_block_forward.7} parent=15 // pred_check_branch
        %107 = sbr.rel (%p105) target = $region20
      $region19: #{resnet_block_forward.7} parent=15 // pred_region
        %p108 = scmp.lt.s32.totalorder %s8, 1
        %s109 = scalar_select %p108, %s8, 1
        %s110 = smul.addr %s109, 32
        %s111 = smul.addr %s110, 8
        %s112 = scalar_lea.vmem %s0, %s111
      $region20: #{resnet_block_forward.7} parent=15 // pred_fallthru
        _
      // Predicated region
      $region21: #{resnet_block_forward.7} parent=15 // pred_check
        %p113 = pneg %p54
      $region22: #{resnet_block_forward.7} parent=15 // pred_check_branch
        %115 = sbr.rel (%p113) target = $region24
      $region23: #{resnet_block_forward.7} parent=15 // pred_region
        %p116 = scmp.lt.s32.totalorder %s8, 1
        %s117 = scalar_select %p116, %s8, 1
        %s118 = smul.addr %s117, 32
        %s119 = smul.addr %s118, 8
        %s120 = scalar_lea.vmem %s1, %s119
      $region24: #{resnet_block_forward.7} parent=15 // pred_fallthru
        _
    $region16: #{resnet_block_forward.7} parent=5 // pred_fallthru
      _
    %p121 = scmp.le.s32.totalorder 1, %s8
    %p122 = scmp.lt.s32.totalorder %s8, 3
    %p123 = pnand %p121, %p122
    %p124 = pneg %p123
    // Predicated region
    $region25: #{resnet_block_forward.7} parent=5 // pred_check
      _
    $region26: #{resnet_block_forward.7} parent=5 // pred_check_branch
      %126 = sbr.rel (%p123) target = $region28
    $region27: #{resnet_block_forward.7} parent=5 // pred_region
      %s127 = ssub.s32 %s8, 1
      %p128 = scmp.lt.s32.totalorder %s13, 1
      %s129 = scalar_select %p128, %s13, 1
      %s130 = smul.addr %s129, 32
      %s131 = smul.addr %s130, 8
      %s132 = scalar_lea.vmem %s0, %s131
      %p133 = pneg %p34
      %p134 = pneg %p31
      %p135 = scmp.lt.s32.totalorder %s13, 1
      %s136 = scalar_select %p135, %s13, 1
      %s137 = smul.addr %s136, 32
      %s138 = smul.addr %s137, 8
      %s139 = scalar_lea.vmem %s1, %s138
      %p140 = pneg %p60
      %p141 = pneg %p57
      %p142 = pneg %p86
      %p143 = pneg %p83
      %p144 = scmp.lt.s32.totalorder %s13, 1
      %s145 = scalar_select %p144, %s13, 1
      %s146 = smul.addr %s145, 32
      %s147 = smul.addr %s146, 8
      %s148 = scalar_lea.vmem %s2, %s147
      %p149 = scmp.lt.s32.totalorder %s13, 1
      %s150 = scalar_select %p149, %s13, 1
      %s151 = smul.addr %s150, 32
      %s152 = smul.addr %s151, 8
      %s153 = scalar_lea.vmem %s0, %s152
      %p154 = scmp.lt.s32.totalorder %s13, 1
      %s155 = scalar_select %p154, %s13, 1
      %s156 = smul.addr %s155, 32
      %s157 = smul.addr %s156, 8
      %s158 = scalar_lea.vmem %s1, %s157
      %p159 = scmp.lt.s32.totalorder %s13, 1
      %s160 = scalar_select %p159, %s13, 1
      %s161 = smul.addr %s160, 32
      %s162 = smul.addr %s161, 8
      %s163 = scalar_lea.vmem %s2, %s162
      %v164 = vld [vmem:[%s153] sm:$0xff]
      %v165 = vld [vmem:[%s153 + $0x8] sm:$0xff]
      %v166 = vld [vmem:[%s153 + $0x10] sm:$0xff]
      %v167 = vld [vmem:[%s153 + $0x18] sm:$0xff]
      %v168 = vld [vmem:[%s153 + $0x20] sm:$0xff]
      %v169 = vld [vmem:[%s153 + $0x28] sm:$0xff]
      %v170 = vld [vmem:[%s153 + $0x30] sm:$0xff]
      %v171 = vld [vmem:[%s153 + $0x38] sm:$0xff]
      %v172 = vld [vmem:[%s153 + $0x40] sm:$0xff]
      %v173 = vld [vmem:[%s153 + $0x48] sm:$0xff]
      %v174 = vld [vmem:[%s153 + $0x50] sm:$0xff]
      %v175 = vld [vmem:[%s153 + $0x58] sm:$0xff]
      %v176 = vld [vmem:[%s153 + $0x60] sm:$0xff]
      %v177 = vld [vmem:[%s153 + $0x68] sm:$0xff]
      %v178 = vld [vmem:[%s153 + $0x70] sm:$0xff]
      %v179 = vld [vmem:[%s153 + $0x78] sm:$0xff]
      %v180 = vld [vmem:[%s153 + $0x80] sm:$0xff]
      %v181 = vld [vmem:[%s153 + $0x88] sm:$0xff]
      %v182 = vld [vmem:[%s153 + $0x90] sm:$0xff]
      %v183 = vld [vmem:[%s153 + $0x98] sm:$0xff]
      %v184 = vld [vmem:[%s153 + $0xa0] sm:$0xff]
      %v185 = vld [vmem:[%s153 + $0xa8] sm:$0xff]
      %v186 = vld [vmem:[%s153 + $0xb0] sm:$0xff]
      %v187 = vld [vmem:[%s153 + $0xb8] sm:$0xff]
      %v188 = vld [vmem:[%s153 + $0xc0] sm:$0xff]
      %v189 = vld [vmem:[%s153 + $0xc8] sm:$0xff]
      %v190 = vld [vmem:[%s153 + $0xd0] sm:$0xff]
      %v191 = vld [vmem:[%s153 + $0xd8] sm:$0xff]
      %v192 = vld [vmem:[%s153 + $0xe0] sm:$0xff]
      %v193 = vld [vmem:[%s153 + $0xe8] sm:$0xff]
      %v194 = vld [vmem:[%s153 + $0xf0] sm:$0xff]
      %v195 = vld [vmem:[%s153 + $0xf8] sm:$0xff]
      %v196 = vadd.f32 %v164, %v165
      %v197 = vadd.f32 %v196, %v166
      %v198 = vadd.f32 %v197, %v167
      %v199 = vadd.f32 %v198, %v168
      %v200 = vadd.f32 %v199, %v169
      %v201 = vadd.f32 %v200, %v170
      %v202 = vadd.f32 %v201, %v171
      %v203 = vadd.f32 %v202, %v172
      %v204 = vadd.f32 %v203, %v173
      %v205 = vadd.f32 %v204, %v174
      %v206 = vadd.f32 %v205, %v175
      %v207 = vadd.f32 %v206, %v176
      %v208 = vadd.f32 %v207, %v177
      %v209 = vadd.f32 %v208, %v178
      %v210 = vadd.f32 %v209, %v179
      %v211 = vadd.f32 %v210, %v180
      %v212 = vadd.f32 %v211, %v181
      %v213 = vadd.f32 %v212, %v182
      %v214 = vadd.f32 %v213, %v183
      %v215 = vadd.f32 %v214, %v184
      %v216 = vadd.f32 %v215, %v185
      %v217 = vadd.f32 %v216, %v186
      %v218 = vadd.f32 %v217, %v187
      %v219 = vadd.f32 %v218, %v188
      %v220 = vadd.f32 %v219, %v189
      %v221 = vadd.f32 %v220, %v190
      %v222 = vadd.f32 %v221, %v191
      %v223 = vadd.f32 %v222, %v192
      %v224 = vadd.f32 %v223, %v193
      %v225 = vadd.f32 %v224, %v194
      %v226 = vadd.f32 %v225, %v195
      %v227 = vrot.slane %v226, 4
      %v228 = vadd.f32 %v226, %v227
      %v229 = vrot.slane %v228, 2
      %v230 = vadd.f32 %v228, %v229
      %v231 = vrot.slane %v230, 1
      %v232 = vadd.f32 %v230, %v231
      %v233 = vrcp.pop 256.0
      %v234 = vmul.f32 256.0, %v233
      %v235 = vsub.f32 1.0, %v234
      %v236 = vmul.f32 %v233, %v235
      %v237 = vadd.f32 %v233, %v236
      %vm238 = vweird.f32 %v233
      %v239 = vsel %vm238, %v233, %v237
      %v240 = vmul.f32 %v232, %v239
      %v241 = vsub.f32 %v164, %v240
      %v242 = vsub.f32 %v165, %v240
      %v243 = vsub.f32 %v166, %v240
      %v244 = vsub.f32 %v167, %v240
      %v245 = vsub.f32 %v168, %v240
      %v246 = vsub.f32 %v169, %v240
      %v247 = vsub.f32 %v170, %v240
      %v248 = vsub.f32 %v171, %v240
      %v249 = vsub.f32 %v172, %v240
      %v250 = vsub.f32 %v173, %v240
      %v251 = vsub.f32 %v174, %v240
      %v252 = vsub.f32 %v175, %v240
      %v253 = vsub.f32 %v176, %v240
      %v254 = vsub.f32 %v177, %v240
      %v255 = vsub.f32 %v178, %v240
      %v256 = vsub.f32 %v179, %v240
      %v257 = vsub.f32 %v180, %v240
      %v258 = vsub.f32 %v181, %v240
      %v259 = vsub.f32 %v182, %v240
      %v260 = vsub.f32 %v183, %v240
      %v261 = vsub.f32 %v184, %v240
      %v262 = vsub.f32 %v185, %v240
      %v263 = vsub.f32 %v186, %v240
      %v264 = vsub.f32 %v187, %v240
      %v265 = vsub.f32 %v188, %v240
      %v266 = vsub.f32 %v189, %v240
      %v267 = vsub.f32 %v190, %v240
      %v268 = vsub.f32 %v191, %v240
      %v269 = vsub.f32 %v192, %v240
      %v270 = vsub.f32 %v193, %v240
      %v271 = vsub.f32 %v194, %v240
      %v272 = vsub.f32 %v195, %v240
      %v273 = vmul.f32 %v241, %v241
      %v274 = vmul.f32 %v242, %v242
      %v275 = vmul.f32 %v243, %v243
      %v276 = vmul.f32 %v244, %v244
      %v277 = vmul.f32 %v245, %v245
      %v278 = vmul.f32 %v246, %v246
      %v279 = vmul.f32 %v247, %v247
      %v280 = vmul.f32 %v248, %v248
      %v281 = vmul.f32 %v249, %v249
      %v282 = vmul.f32 %v250, %v250
      %v283 = vmul.f32 %v251, %v251
      %v284 = vmul.f32 %v252, %v252
      %v285 = vmul.f32 %v253, %v253
      %v286 = vmul.f32 %v254, %v254
      %v287 = vmul.f32 %v255, %v255
      %v288 = vmul.f32 %v256, %v256
      %v289 = vmul.f32 %v257, %v257
      %v290 = vmul.f32 %v258, %v258
      %v291 = vmul.f32 %v259, %v259
      %v292 = vmul.f32 %v260, %v260
      %v293 = vmul.f32 %v261, %v261
      %v294 = vmul.f32 %v262, %v262
      %v295 = vmul.f32 %v263, %v263
      %v296 = vmul.f32 %v264, %v264
      %v297 = vmul.f32 %v265, %v265
      %v298 = vmul.f32 %v266, %v266
      %v299 = vmul.f32 %v267, %v267
      %v300 = vmul.f32 %v268, %v268
      %v301 = vmul.f32 %v269, %v269
      %v302 = vmul.f32 %v270, %v270
      %v303 = vmul.f32 %v271, %v271
      %v304 = vmul.f32 %v272, %v272
      %v305 = vadd.f32 %v273, %v274
      %v306 = vadd.f32 %v305, %v275
      %v307 = vadd.f32 %v306, %v276
      %v308 = vadd.f32 %v307, %v277
      %v309 = vadd.f32 %v308, %v278
      %v310 = vadd.f32 %v309, %v279
      %v311 = vadd.f32 %v310, %v280
      %v312 = vadd.f32 %v311, %v281
      %v313 = vadd.f32 %v312, %v282
      %v314 = vadd.f32 %v313, %v283
      %v315 = vadd.f32 %v314, %v284
      %v316 = vadd.f32 %v315, %v285
      %v317 = vadd.f32 %v316, %v286
      %v318 = vadd.f32 %v317, %v287
      %v319 = vadd.f32 %v318, %v288
      %v320 = vadd.f32 %v319, %v289
      %v321 = vadd.f32 %v320, %v290
      %v322 = vadd.f32 %v321, %v291
      %v323 = vadd.f32 %v322, %v292
      %v324 = vadd.f32 %v323, %v293
      %v325 = vadd.f32 %v324, %v294
      %v326 = vadd.f32 %v325, %v295
      %v327 = vadd.f32 %v326, %v296
      %v328 = vadd.f32 %v327, %v297
      %v329 = vadd.f32 %v328, %v298
      %v330 = vadd.f32 %v329, %v299
      %v331 = vadd.f32 %v330, %v300
      %v332 = vadd.f32 %v331, %v301
      %v333 = vadd.f32 %v332, %v302
      %v334 = vadd.f32 %v333, %v303
      %v335 = vadd.f32 %v334, %v304
      %v336 = vrot.slane %v335, 4
      %v337 = vadd.f32 %v335, %v336
      %v338 = vrot.slane %v337, 2
      %v339 = vadd.f32 %v337, %v338
      %v340 = vrot.slane %v339, 1
      %v341 = vadd.f32 %v339, %v340
      %v342 = vmul.f32 %v341, %v239
      %v343 = vadd.f32 %v342, 1e-05
      %v344 = vrsqrt.pop %v343
      %v345 = vmul.f32 %v344, %v343
      %v346 = vmul.f32 %v345, %v344
      %v347 = vmul.f32 0.5, %v346
      %v348 = vsub.f32 1.5, %v347
      %v349 = vmul.f32 %v344, %v348
      %vm350 = vweird.f32 %v343
      %vm351 = vweird.f32 %v344
      %vm352 = vmor %vm350, %vm351
      %v353 = vsel %vm352, %v344, %v349
      %v354 = vmul.f32 %v241, %v353
      %v355 = vmul.f32 %v242, %v353
      %v356 = vmul.f32 %v243, %v353
      %v357 = vmul.f32 %v244, %v353
      %v358 = vmul.f32 %v245, %v353
      %v359 = vmul.f32 %v246, %v353
      %v360 = vmul.f32 %v247, %v353
      %v361 = vmul.f32 %v248, %v353
      %v362 = vmul.f32 %v249, %v353
      %v363 = vmul.f32 %v250, %v353
      %v364 = vmul.f32 %v251, %v353
      %v365 = vmul.f32 %v252, %v353
      %v366 = vmul.f32 %v253, %v353
      %v367 = vmul.f32 %v254, %v353
      %v368 = vmul.f32 %v255, %v353
      %v369 = vmul.f32 %v256, %v353
      %v370 = vmul.f32 %v257, %v353
      %v371 = vmul.f32 %v258, %v353
      %v372 = vmul.f32 %v259, %v353
      %v373 = vmul.f32 %v260, %v353
      %v374 = vmul.f32 %v261, %v353
      %v375 = vmul.f32 %v262, %v353
      %v376 = vmul.f32 %v263, %v353
      %v377 = vmul.f32 %v264, %v353
      %v378 = vmul.f32 %v265, %v353
      %v379 = vmul.f32 %v266, %v353
      %v380 = vmul.f32 %v267, %v353
      %v381 = vmul.f32 %v268, %v353
      %v382 = vmul.f32 %v269, %v353
      %v383 = vmul.f32 %v270, %v353
      %v384 = vmul.f32 %v271, %v353
      %v385 = vmul.f32 %v272, %v353
      %v386 = vld [vmem:[%s158] sm:$0xff]
      %v387 = vld [vmem:[%s158 + $0x8] sm:$0xff]
      %v388 = vld [vmem:[%s158 + $0x10] sm:$0xff]
      %v389 = vld [vmem:[%s158 + $0x18] sm:$0xff]
      %v390 = vld [vmem:[%s158 + $0x20] sm:$0xff]
      %v391 = vld [vmem:[%s158 + $0x28] sm:$0xff]
      %v392 = vld [vmem:[%s158 + $0x30] sm:$0xff]
      %v393 = vld [vmem:[%s158 + $0x38] sm:$0xff]
      %v394 = vld [vmem:[%s158 + $0x40] sm:$0xff]
      %v395 = vld [vmem:[%s158 + $0x48] sm:$0xff]
      %v396 = vld [vmem:[%s158 + $0x50] sm:$0xff]
      %v397 = vld [vmem:[%s158 + $0x58] sm:$0xff]
      %v398 = vld [vmem:[%s158 + $0x60] sm:$0xff]
      %v399 = vld [vmem:[%s158 + $0x68] sm:$0xff]
      %v400 = vld [vmem:[%s158 + $0x70] sm:$0xff]
      %v401 = vld [vmem:[%s158 + $0x78] sm:$0xff]
      %v402 = vld [vmem:[%s158 + $0x80] sm:$0xff]
      %v403 = vld [vmem:[%s158 + $0x88] sm:$0xff]
      %v404 = vld [vmem:[%s158 + $0x90] sm:$0xff]
      %v405 = vld [vmem:[%s158 + $0x98] sm:$0xff]
      %v406 = vld [vmem:[%s158 + $0xa0] sm:$0xff]
      %v407 = vld [vmem:[%s158 + $0xa8] sm:$0xff]
      %v408 = vld [vmem:[%s158 + $0xb0] sm:$0xff]
      %v409 = vld [vmem:[%s158 + $0xb8] sm:$0xff]
      %v410 = vld [vmem:[%s158 + $0xc0] sm:$0xff]
      %v411 = vld [vmem:[%s158 + $0xc8] sm:$0xff]
      %v412 = vld [vmem:[%s158 + $0xd0] sm:$0xff]
      %v413 = vld [vmem:[%s158 + $0xd8] sm:$0xff]
      %v414 = vld [vmem:[%s158 + $0xe0] sm:$0xff]
      %v415 = vld [vmem:[%s158 + $0xe8] sm:$0xff]
      %v416 = vld [vmem:[%s158 + $0xf0] sm:$0xff]
      %v417 = vld [vmem:[%s158 + $0xf8] sm:$0xff]
      %v418 = vadd.f32 %v386, %v354
      %v419 = vadd.f32 %v387, %v355
      %v420 = vadd.f32 %v388, %v356
      %v421 = vadd.f32 %v389, %v357
      %v422 = vadd.f32 %v390, %v358
      %v423 = vadd.f32 %v391, %v359
      %v424 = vadd.f32 %v392, %v360
      %v425 = vadd.f32 %v393, %v361
      %v426 = vadd.f32 %v394, %v362
      %v427 = vadd.f32 %v395, %v363
      %v428 = vadd.f32 %v396, %v364
      %v429 = vadd.f32 %v397, %v365
      %v430 = vadd.f32 %v398, %v366
      %v431 = vadd.f32 %v399, %v367
      %v432 = vadd.f32 %v400, %v368
      %v433 = vadd.f32 %v401, %v369
      %v434 = vadd.f32 %v402, %v370
      %v435 = vadd.f32 %v403, %v371
      %v436 = vadd.f32 %v404, %v372
      %v437 = vadd.f32 %v405, %v373
      %v438 = vadd.f32 %v406, %v374
      %v439 = vadd.f32 %v407, %v375
      %v440 = vadd.f32 %v408, %v376
      %v441 = vadd.f32 %v409, %v377
      %v442 = vadd.f32 %v410, %v378
      %v443 = vadd.f32 %v411, %v379
      %v444 = vadd.f32 %v412, %v380
      %v445 = vadd.f32 %v413, %v381
      %v446 = vadd.f32 %v414, %v382
      %v447 = vadd.f32 %v415, %v383
      %v448 = vadd.f32 %v416, %v384
      %v449 = vadd.f32 %v417, %v385
      %450 = vst [vmem:[%s163] sm:$0xff] %v418
      %451 = vst [vmem:[%s163 + $0x8] sm:$0xff] %v419
      %452 = vst [vmem:[%s163 + $0x10] sm:$0xff] %v420
      %453 = vst [vmem:[%s163 + $0x18] sm:$0xff] %v421
      %454 = vst [vmem:[%s163 + $0x20] sm:$0xff] %v422
      %455 = vst [vmem:[%s163 + $0x28] sm:$0xff] %v423
      %456 = vst [vmem:[%s163 + $0x30] sm:$0xff] %v424
      %457 = vst [vmem:[%s163 + $0x38] sm:$0xff] %v425
      %458 = vst [vmem:[%s163 + $0x40] sm:$0xff] %v426
      %459 = vst [vmem:[%s163 + $0x48] sm:$0xff] %v427
      %460 = vst [vmem:[%s163 + $0x50] sm:$0xff] %v428
      %461 = vst [vmem:[%s163 + $0x58] sm:$0xff] %v429
      %462 = vst [vmem:[%s163 + $0x60] sm:$0xff] %v430
      %463 = vst [vmem:[%s163 + $0x68] sm:$0xff] %v431
      %464 = vst [vmem:[%s163 + $0x70] sm:$0xff] %v432
      %465 = vst [vmem:[%s163 + $0x78] sm:$0xff] %v433
      %466 = vst [vmem:[%s163 + $0x80] sm:$0xff] %v434
      %467 = vst [vmem:[%s163 + $0x88] sm:$0xff] %v435
      %468 = vst [vmem:[%s163 + $0x90] sm:$0xff] %v436
      %469 = vst [vmem:[%s163 + $0x98] sm:$0xff] %v437
      %470 = vst [vmem:[%s163 + $0xa0] sm:$0xff] %v438
      %471 = vst [vmem:[%s163 + $0xa8] sm:$0xff] %v439
      %472 = vst [vmem:[%s163 + $0xb0] sm:$0xff] %v440
      %473 = vst [vmem:[%s163 + $0xb8] sm:$0xff] %v441
      %474 = vst [vmem:[%s163 + $0xc0] sm:$0xff] %v442
      %475 = vst [vmem:[%s163 + $0xc8] sm:$0xff] %v443
      %476 = vst [vmem:[%s163 + $0xd0] sm:$0xff] %v444
      %477 = vst [vmem:[%s163 + $0xd8] sm:$0xff] %v445
      %478 = vst [vmem:[%s163 + $0xe0] sm:$0xff] %v446
      %479 = vst [vmem:[%s163 + $0xe8] sm:$0xff] %v447
      %480 = vst [vmem:[%s163 + $0xf0] sm:$0xff] %v448
      %481 = vst [vmem:[%s163 + $0xf8] sm:$0xff] %v449
      %p482 = scmp.lt.s32.totalorder %s13, 1
      %s483 = scalar_select %p482, %s13, 1
      %s484 = smul.addr %s483, 32
      %s485 = smul.addr %s484, 8
      %s486 = scalar_lea.vmem %s2, %s485
      // Predicated region
      $region29: #{resnet_block_forward.7} parent=27 // pred_check
        %p487 = pneg %p83
      $region30: #{resnet_block_forward.7} parent=27 // pred_check_branch
        %489 = sbr.rel (%p487) target = $region32
      $region31: #{resnet_block_forward.7} parent=27 // pred_region
        _
      $region32: #{resnet_block_forward.7} parent=27 // pred_fallthru
        _
    $region28: #{resnet_block_forward.7} parent=5 // pred_fallthru
      _
    %p490 = scmp.le.s32.totalorder 2, %s8
    // Predicated region
    $region33: #{resnet_block_forward.7} parent=5 // pred_check
      %p491 = pneg %p490
    $region34: #{resnet_block_forward.7} parent=5 // pred_check_branch
      %493 = sbr.rel (%p491) target = $region36
    $region35: #{resnet_block_forward.7} parent=5 // pred_region
      %s494 = ssub.s32 %s8, 2
      // Predicated region
      $region37: #{resnet_block_forward.7} parent=35 // pred_check
        %p495 = pneg %p89
      $region38: #{resnet_block_forward.7} parent=35 // pred_check_branch
        %497 = sbr.rel (%p495) target = $region40
      $region39: #{resnet_block_forward.7} parent=35 // pred_region
        %p498 = scmp.lt.s32.totalorder %s14, 1
        %s499 = scalar_select %p498, %s14, 1
        %s500 = smul.addr %s499, 32
        %s501 = smul.addr %s500, 8
        %s502 = scalar_lea.vmem %s2, %s501
      $region40: #{resnet_block_forward.7} parent=35 // pred_fallthru
        _
    $region36: #{resnet_block_forward.7} parent=5 // pred_fallthru
      _
  $region6: #{resnet_block_forward.7} parent=0 // loop_footer
    %s12 = sadd.s32 1, %s8
  $region7: #{resnet_block_forward.7} parent=0 // loop_footer_branch
    %7 = sbr.rel target = $region3
  $region8: #{resnet_block_forward.7} parent=0 // loop_exit
    _

</llo_original>
